<compile_context>
chip_gen: v7x
topology: tpu7x:2x2x1
jax: 0.10.0
libtpu: 0.0.40
codegen_flags: <defaults>
</compile_context>

<pallas_src>
import functools

import jax
import jax.numpy as jnp
from jax import lax
from jax.experimental import pallas as pl
from jax.experimental.pallas import tpu as pltpu


def _round_up(x, m):
    return (x + m - 1) // m * m


def celeba_cond_kernel(seed_ref, attr_ref, w1f_ref, b1_ref, w2_ref, b2_ref,
                       out_ref, *, apply_dropout, keep_threshold):
    TB, A = attr_ref.shape
    Vp, E = w1f_ref.shape

    # attr + 1 (fused in-kernel).  Expected values: {0, 1, 2}.
    idx = attr_ref[...] + 1                                        # (TB, A) int32

    if apply_dropout:
        # Counter-based hash PRNG (murmur-style finalizer) over
        # (seed, absolute_row, column).  Pure jnp uint32 ops -> lowers on TPU
        # and in interpret mode; mask is independent of the batch tiling.
        row0 = (pl.program_id(0) * TB).astype(jnp.uint32)
        rows = lax.broadcasted_iota(jnp.uint32, (TB, A), 0) + row0
        cols = lax.broadcasted_iota(jnp.uint32, (TB, A), 1)
        h = seed_ref[0].astype(jnp.uint32)
        h = h ^ (rows * jnp.uint32(0x9E3779B9)) ^ (cols * jnp.uint32(0x85EBCA6B))
        h = h ^ (h >> 16)
        h = h * jnp.uint32(0x7FEB352D)
        h = h ^ (h >> 15)
        h = h * jnp.uint32(0x846CA68B)
        h = h ^ (h >> 16)
        keep = (h >= jnp.uint32(keep_threshold)).astype(idx.dtype)  # P = 1 - dropout
        idx = idx * keep          # dropped -> 0 (aliases attr == -1, PyTorch quirk)

    # Offset-folded multi-hot: lane (3*a + idx[:, a]) is hot for each attribute a.
    lane = lax.broadcasted_iota(jnp.int32, (TB, Vp), 1)            # (TB, Vp)
    mhot = jnp.zeros((TB, Vp), jnp.float32)
    for a in range(A):                                             # static unroll, VPU-only
        mhot = mhot + (lane == (idx[:, a:a + 1] + 3 * a)).astype(jnp.float32)
    mhot = mhot.astype(jnp.bfloat16)

    # One (TB,Vp)x(Vp,E) MXU matmul = embedding lookup + flatten + first Linear.
    pre = jnp.dot(mhot, w1f_ref[...],
                  preferred_element_type=jnp.float32) + b1_ref[...]
    hact = pre * jax.nn.sigmoid(pre)                               # SiLU in f32 (v5e-safe)
    out = jnp.dot(hact.astype(jnp.bfloat16), w2_ref[...],
                  preferred_element_type=jnp.float32) + b2_ref[...]
    out_ref[...] = out.astype(out_ref.dtype)


def prepare_celeba_params(params, attr_dim):
    """One-time weight preprocessing (hoist out of the per-call path).

    Folds the embedding table into the first Linear with the per-attribute
    offset baked into the lane index:
        w1f[3*a + v, e] = sum_c table[v, c] * w1[a*C + c, e],   v in {0, 1, 2}.
    Only table rows 0..2 are ever used since idx = attr + 1 in {0,1,2}
    (attr in {-1,0,1}; dropout maps indices to 0).
    """
    table, w1, b1, w2, b2 = params
    V, C = table.shape
    E = w2.shape[1]
    A = attr_dim
    assert w1.shape == (A * C, E) and V == 3 * A and w2.shape == (E, E)

    w1f = jnp.einsum("vc,ace->ave",
                     table[:3].astype(jnp.float32),
                     w1.reshape(A, C, E).astype(jnp.float32))      # (A, 3, E)
    w1f = w1f.reshape(3 * A, E)                                    # row 3*a + v
    Vp = _round_up(3 * A, 128)
    w1f = jnp.pad(w1f, ((0, Vp - 3 * A), (0, 0))).astype(jnp.bfloat16)

    return dict(
        w1f=w1f,
        b1=b1.reshape(1, E).astype(jnp.float32),
        w2=w2.astype(jnp.bfloat16),
        b2=b2.reshape(1, E).astype(jnp.float32),
        attr_dim=A, embed_dim=E, vocab_pad=Vp,
    )


def celeba_conditioning(attr, prepared, *, dropout=0.3, training=True, seed=0):
    """attr: (B, A) int array with values in {-1, 0, 1}."""
    A = prepared["attr_dim"]
    E = prepared["embed_dim"]
    Vp = prepared["vocab_pad"]
    B = attr.shape[0]
    assert attr.shape == (B, A)

    # Batch tiling: sublane-aligned; >= 2 grid steps when B >= 16 so the
    # "parallel" axis shards across v7x's two TensorCores; cap tile at 128.
    Bp8 = _round_up(B, 8)
    if Bp8 >= 16:
        tile_b = min(128, _round_up((Bp8 + 1) // 2, 8))
    else:
        tile_b = Bp8
    Bp = _round_up(Bp8, tile_b)

    attr_i = attr.astype(jnp.int32)
    if Bp != B:
        attr_i = jnp.pad(attr_i, ((0, Bp - B), (0, 0)))

    apply_dropout = bool(training) and float(dropout) > 0.0
    # keep if uniform_u32 >= dropout * 2^32  ->  P(keep) = 1 - dropout.
    keep_threshold = min(int(float(dropout) * 2.0 ** 32), 2 ** 32 - 1)
    seed_arr = jnp.asarray([seed], dtype=jnp.int32)

    kernel = functools.partial(celeba_cond_kernel,
                               apply_dropout=apply_dropout,
                               keep_threshold=keep_threshold)

    flops = 2 * Bp * (Vp + E) * E
    bytes_accessed = (Bp * A * 4 + Vp * E * 2 + E * E * 2 + 2 * E * 4 + Bp * E * 4)

    out = pl.pallas_call(
        kernel,
        out_shape=jax.ShapeDtypeStruct((Bp, E), jnp.float32),
        grid_spec=pltpu.PrefetchScalarGridSpec(
            num_scalar_prefetch=1,
            grid=(Bp // tile_b,),
            in_specs=[
                pl.BlockSpec((tile_b, A), lambda i, seed: (i, 0)),   # attr tile
                pl.BlockSpec((Vp, E), lambda i, seed: (0, 0)),       # folded W1 (resident)
                pl.BlockSpec((1, E), lambda i, seed: (0, 0)),        # b1 (resident)
                pl.BlockSpec((E, E), lambda i, seed: (0, 0)),        # w2 (resident)
                pl.BlockSpec((1, E), lambda i, seed: (0, 0)),        # b2 (resident)
            ],
            out_specs=pl.BlockSpec((tile_b, E), lambda i, seed: (i, 0)),
        ),
        compiler_params=pltpu.CompilerParams(
            dimension_semantics=("parallel",)),
        cost_estimate=pl.CostEstimate(flops=flops,
                                      transcendentals=Bp * E,
                                      bytes_accessed=bytes_accessed),
    )(seed_arr, attr_i, prepared["w1f"], prepared["b1"],
      prepared["w2"], prepared["b2"])

    return out if Bp == B else out[:B]


def _reference(attr, params):
    """Pure-JAX f32 reference of the PyTorch forward (no dropout)."""
    table, w1, b1, w2, b2 = params
    idx = attr + 1
    emb = table[idx]                                   # (B, A, C)
    x = emb.reshape(attr.shape[0], -1)                 # (B, A*C)
    h = x @ w1 + b1
    h = h * jax.nn.sigmoid(h)
    return h @ w2 + b2


if __name__ == "__main__":
    # Shapes from the module spec: attr_dim=40, ch=128 -> embed_dim=512; small batch.
    B, ATTR_DIM, CH = 32, 40, 128
    E = 4 * CH
    VOCAB = 3 * ATTR_DIM

    key = jax.random.PRNGKey(0)
    k_attr, k_tab, k_w1, k_b1, k_w2, k_b2 = jax.random.split(key, 6)

    # CelebA-style attributes in {-1, 0, 1}; after +1 they index {0, 1, 2}.
    attr = jax.random.randint(k_attr, (B, ATTR_DIM), -1, 2, dtype=jnp.int32)

    table = jax.random.normal(k_tab, (VOCAB, CH), jnp.float32)
    w1 = jax.random.normal(k_w1, (ATTR_DIM * CH, E), jnp.float32) / (ATTR_DIM * CH) ** 0.5
    b1 = jax.random.normal(k_b1, (E,), jnp.float32) * 0.01
    w2 = jax.random.normal(k_w2, (E, E), jnp.float32) / E ** 0.5
    b2 = jax.random.normal(k_b2, (E,), jnp.float32) * 0.01
    params = (table, w1, b1, w2, b2)

    # One-time weight fold (hoisted out of the per-call path).
    prepared = prepare_celeba_params(params, ATTR_DIM)

    # Deterministic (eval) path: validate against the pure-JAX reference.
    out_eval = celeba_conditioning(attr, prepared, dropout=0.3, training=False)
    jax.block_until_ready(out_eval)
    ref = _reference(attr, params)
    rel_err = jnp.linalg.norm(out_eval - ref) / jnp.linalg.norm(ref)
    assert out_eval.shape == (B, E) and out_eval.dtype == jnp.float32
    assert bool(rel_err < 3e-2), f"relative error too large: {rel_err}"

    # Training path: exercises the fused in-kernel index dropout.
    out_train = celeba_conditioning(attr, prepared, dropout=0.3, training=True, seed=123)
    jax.block_until_ready(out_train)
    assert out_train.shape == (B, E)
    assert bool(jnp.all(jnp.isfinite(out_train)))

    print("KERNEL_OK")
</pallas_src>

<mosaic_0001>
module attributes {stable_mosaic.version = 11 : i64} {
  func.func @celeba_cond_kernel(%arg0: i32, %arg1: memref<1xi32, #tpu.memory_space<smem>>, %arg2: memref<16x40xi32, #tpu.memory_space<vmem>>, %arg3: memref<128x512xbf16, #tpu.memory_space<vmem>>, %arg4: memref<1x512xf32, #tpu.memory_space<vmem>>, %arg5: memref<512x512xbf16, #tpu.memory_space<vmem>>, %arg6: memref<1x512xf32, #tpu.memory_space<vmem>>, %arg7: memref<16x512xf32, #tpu.memory_space<vmem>>) attributes {dimension_semantics = [#tpu.dimension_semantics<parallel>], iteration_bounds = array<i64: 2>, scalar_prefetch = 1 : i64, scratch_operands = 0 : i64, tpu.core_type = #tpu.core_type<tc>, window_params = [{transform_indices = @transform_0, window_bounds = array<i64: 16, 40>}, {pipeline_mode = #tpu.pipeline_mode<synchronous>, transform_indices = @transform_1, window_bounds = array<i64: 128, 512>}, {pipeline_mode = #tpu.pipeline_mode<synchronous>, transform_indices = @transform_2, window_bounds = array<i64: 1, 512>}, {pipeline_mode = #tpu.pipeline_mode<synchronous>, transform_indices = @transform_3, window_bounds = array<i64: 512, 512>}, {pipeline_mode = #tpu.pipeline_mode<synchronous>, transform_indices = @transform_4, window_bounds = array<i64: 1, 512>}, {transform_indices = @transform_5, window_bounds = array<i64: 16, 512>}]} {
    %c0 = arith.constant 0 : index
    %c0_0 = arith.constant 0 : index
    %0 = vector.load %arg2[%c0, %c0_0] : memref<16x40xi32, #tpu.memory_space<vmem>>, vector<16x40xi32>
    %c1_i32 = arith.constant 1 : i32
    %1 = vector.broadcast %c1_i32 : i32 to vector<16x40xi32>
    %2 = arith.addi %0, %1 : vector<16x40xi32>
    %3 = tpu.iota {dimensions = array<i32: 1>} : vector<16x128xi32>
    %cst = arith.constant 0.000000e+00 : f32
    %4 = vector.broadcast %cst : f32 to vector<16x128xf32>
    %5 = vector.extract_strided_slice %2 {offsets = [0, 0], sizes = [16, 1], strides = [1, 1]} : vector<16x40xi32> to vector<16x1xi32>
    %c0_i32 = arith.constant 0 : i32
    %6 = vector.broadcast %c0_i32 : i32 to vector<16x1xi32>
    %7 = arith.addi %5, %6 : vector<16x1xi32>
    %8 = vector.broadcast %7 : vector<16x1xi32> to vector<16x128xi32>
    %9 = arith.cmpi eq, %3, %8 : vector<16x128xi32>
    %10 = arith.extui %9 : vector<16x128xi1> to vector<16x128xi32>
    %11 = arith.sitofp %10 : vector<16x128xi32> to vector<16x128xf32>
    %12 = arith.addf %4, %11 : vector<16x128xf32>
    %13 = vector.extract_strided_slice %2 {offsets = [0, 1], sizes = [16, 1], strides = [1, 1]} : vector<16x40xi32> to vector<16x1xi32>
    %c3_i32 = arith.constant 3 : i32
    %14 = vector.broadcast %c3_i32 : i32 to vector<16x1xi32>
    %15 = arith.addi %13, %14 : vector<16x1xi32>
    %16 = vector.broadcast %15 : vector<16x1xi32> to vector<16x128xi32>
    %17 = arith.cmpi eq, %3, %16 : vector<16x128xi32>
    %18 = arith.extui %17 : vector<16x128xi1> to vector<16x128xi32>
    %19 = arith.sitofp %18 : vector<16x128xi32> to vector<16x128xf32>
    %20 = arith.addf %12, %19 : vector<16x128xf32>
    %21 = vector.extract_strided_slice %2 {offsets = [0, 2], sizes = [16, 1], strides = [1, 1]} : vector<16x40xi32> to vector<16x1xi32>
    %c6_i32 = arith.constant 6 : i32
    %22 = vector.broadcast %c6_i32 : i32 to vector<16x1xi32>
    %23 = arith.addi %21, %22 : vector<16x1xi32>
    %24 = vector.broadcast %23 : vector<16x1xi32> to vector<16x128xi32>
    %25 = arith.cmpi eq, %3, %24 : vector<16x128xi32>
    %26 = arith.extui %25 : vector<16x128xi1> to vector<16x128xi32>
    %27 = arith.sitofp %26 : vector<16x128xi32> to vector<16x128xf32>
    %28 = arith.addf %20, %27 : vector<16x128xf32>
    %29 = vector.extract_strided_slice %2 {offsets = [0, 3], sizes = [16, 1], strides = [1, 1]} : vector<16x40xi32> to vector<16x1xi32>
    %c9_i32 = arith.constant 9 : i32
    %30 = vector.broadcast %c9_i32 : i32 to vector<16x1xi32>
    %31 = arith.addi %29, %30 : vector<16x1xi32>
    %32 = vector.broadcast %31 : vector<16x1xi32> to vector<16x128xi32>
    %33 = arith.cmpi eq, %3, %32 : vector<16x128xi32>
    %34 = arith.extui %33 : vector<16x128xi1> to vector<16x128xi32>
    %35 = arith.sitofp %34 : vector<16x128xi32> to vector<16x128xf32>
    %36 = arith.addf %28, %35 : vector<16x128xf32>
    %37 = vector.extract_strided_slice %2 {offsets = [0, 4], sizes = [16, 1], strides = [1, 1]} : vector<16x40xi32> to vector<16x1xi32>
    %c12_i32 = arith.constant 12 : i32
    %38 = vector.broadcast %c12_i32 : i32 to vector<16x1xi32>
    %39 = arith.addi %37, %38 : vector<16x1xi32>
    %40 = vector.broadcast %39 : vector<16x1xi32> to vector<16x128xi32>
    %41 = arith.cmpi eq, %3, %40 : vector<16x128xi32>
    %42 = arith.extui %41 : vector<16x128xi1> to vector<16x128xi32>
    %43 = arith.sitofp %42 : vector<16x128xi32> to vector<16x128xf32>
    %44 = arith.addf %36, %43 : vector<16x128xf32>
    %45 = vector.extract_strided_slice %2 {offsets = [0, 5], sizes = [16, 1], strides = [1, 1]} : vector<16x40xi32> to vector<16x1xi32>
    %c15_i32 = arith.constant 15 : i32
    %46 = vector.broadcast %c15_i32 : i32 to vector<16x1xi32>
    %47 = arith.addi %45, %46 : vector<16x1xi32>
    %48 = vector.broadcast %47 : vector<16x1xi32> to vector<16x128xi32>
    %49 = arith.cmpi eq, %3, %48 : vector<16x128xi32>
    %50 = arith.extui %49 : vector<16x128xi1> to vector<16x128xi32>
    %51 = arith.sitofp %50 : vector<16x128xi32> to vector<16x128xf32>
    %52 = arith.addf %44, %51 : vector<16x128xf32>
    %53 = vector.extract_strided_slice %2 {offsets = [0, 6], sizes = [16, 1], strides = [1, 1]} : vector<16x40xi32> to vector<16x1xi32>
    %c18_i32 = arith.constant 18 : i32
    %54 = vector.broadcast %c18_i32 : i32 to vector<16x1xi32>
    %55 = arith.addi %53, %54 : vector<16x1xi32>
    %56 = vector.broadcast %55 : vector<16x1xi32> to vector<16x128xi32>
    %57 = arith.cmpi eq, %3, %56 : vector<16x128xi32>
    %58 = arith.extui %57 : vector<16x128xi1> to vector<16x128xi32>
    %59 = arith.sitofp %58 : vector<16x128xi32> to vector<16x128xf32>
    %60 = arith.addf %52, %59 : vector<16x128xf32>
    %61 = vector.extract_strided_slice %2 {offsets = [0, 7], sizes = [16, 1], strides = [1, 1]} : vector<16x40xi32> to vector<16x1xi32>
    %c21_i32 = arith.constant 21 : i32
    %62 = vector.broadcast %c21_i32 : i32 to vector<16x1xi32>
    %63 = arith.addi %61, %62 : vector<16x1xi32>
    %64 = vector.broadcast %63 : vector<16x1xi32> to vector<16x128xi32>
    %65 = arith.cmpi eq, %3, %64 : vector<16x128xi32>
    %66 = arith.extui %65 : vector<16x128xi1> to vector<16x128xi32>
    %67 = arith.sitofp %66 : vector<16x128xi32> to vector<16x128xf32>
    %68 = arith.addf %60, %67 : vector<16x128xf32>
    %69 = vector.extract_strided_slice %2 {offsets = [0, 8], sizes = [16, 1], strides = [1, 1]} : vector<16x40xi32> to vector<16x1xi32>
    %c24_i32 = arith.constant 24 : i32
    %70 = vector.broadcast %c24_i32 : i32 to vector<16x1xi32>
    %71 = arith.addi %69, %70 : vector<16x1xi32>
    %72 = vector.broadcast %71 : vector<16x1xi32> to vector<16x128xi32>
    %73 = arith.cmpi eq, %3, %72 : vector<16x128xi32>
    %74 = arith.extui %73 : vector<16x128xi1> to vector<16x128xi32>
    %75 = arith.sitofp %74 : vector<16x128xi32> to vector<16x128xf32>
    %76 = arith.addf %68, %75 : vector<16x128xf32>
    %77 = vector.extract_strided_slice %2 {offsets = [0, 9], sizes = [16, 1], strides = [1, 1]} : vector<16x40xi32> to vector<16x1xi32>
    %c27_i32 = arith.constant 27 : i32
    %78 = vector.broadcast %c27_i32 : i32 to vector<16x1xi32>
    %79 = arith.addi %77, %78 : vector<16x1xi32>
    %80 = vector.broadcast %79 : vector<16x1xi32> to vector<16x128xi32>
    %81 = arith.cmpi eq, %3, %80 : vector<16x128xi32>
    %82 = arith.extui %81 : vector<16x128xi1> to vector<16x128xi32>
    %83 = arith.sitofp %82 : vector<16x128xi32> to vector<16x128xf32>
    %84 = arith.addf %76, %83 : vector<16x128xf32>
    %85 = vector.extract_strided_slice %2 {offsets = [0, 10], sizes = [16, 1], strides = [1, 1]} : vector<16x40xi32> to vector<16x1xi32>
    %c30_i32 = arith.constant 30 : i32
    %86 = vector.broadcast %c30_i32 : i32 to vector<16x1xi32>
    %87 = arith.addi %85, %86 : vector<16x1xi32>
    %88 = vector.broadcast %87 : vector<16x1xi32> to vector<16x128xi32>
    %89 = arith.cmpi eq, %3, %88 : vector<16x128xi32>
    %90 = arith.extui %89 : vector<16x128xi1> to vector<16x128xi32>
    %91 = arith.sitofp %90 : vector<16x128xi32> to vector<16x128xf32>
    %92 = arith.addf %84, %91 : vector<16x128xf32>
    %93 = vector.extract_strided_slice %2 {offsets = [0, 11], sizes = [16, 1], strides = [1, 1]} : vector<16x40xi32> to vector<16x1xi32>
    %c33_i32 = arith.constant 33 : i32
    %94 = vector.broadcast %c33_i32 : i32 to vector<16x1xi32>
    %95 = arith.addi %93, %94 : vector<16x1xi32>
    %96 = vector.broadcast %95 : vector<16x1xi32> to vector<16x128xi32>
    %97 = arith.cmpi eq, %3, %96 : vector<16x128xi32>
    %98 = arith.extui %97 : vector<16x128xi1> to vector<16x128xi32>
    %99 = arith.sitofp %98 : vector<16x128xi32> to vector<16x128xf32>
    %100 = arith.addf %92, %99 : vector<16x128xf32>
    %101 = vector.extract_strided_slice %2 {offsets = [0, 12], sizes = [16, 1], strides = [1, 1]} : vector<16x40xi32> to vector<16x1xi32>
    %c36_i32 = arith.constant 36 : i32
    %102 = vector.broadcast %c36_i32 : i32 to vector<16x1xi32>
    %103 = arith.addi %101, %102 : vector<16x1xi32>
    %104 = vector.broadcast %103 : vector<16x1xi32> to vector<16x128xi32>
    %105 = arith.cmpi eq, %3, %104 : vector<16x128xi32>
    %106 = arith.extui %105 : vector<16x128xi1> to vector<16x128xi32>
    %107 = arith.sitofp %106 : vector<16x128xi32> to vector<16x128xf32>
    %108 = arith.addf %100, %107 : vector<16x128xf32>
    %109 = vector.extract_strided_slice %2 {offsets = [0, 13], sizes = [16, 1], strides = [1, 1]} : vector<16x40xi32> to vector<16x1xi32>
    %c39_i32 = arith.constant 39 : i32
    %110 = vector.broadcast %c39_i32 : i32 to vector<16x1xi32>
    %111 = arith.addi %109, %110 : vector<16x1xi32>
    %112 = vector.broadcast %111 : vector<16x1xi32> to vector<16x128xi32>
    %113 = arith.cmpi eq, %3, %112 : vector<16x128xi32>
    %114 = arith.extui %113 : vector<16x128xi1> to vector<16x128xi32>
    %115 = arith.sitofp %114 : vector<16x128xi32> to vector<16x128xf32>
    %116 = arith.addf %108, %115 : vector<16x128xf32>
    %117 = vector.extract_strided_slice %2 {offsets = [0, 14], sizes = [16, 1], strides = [1, 1]} : vector<16x40xi32> to vector<16x1xi32>
    %c42_i32 = arith.constant 42 : i32
    %118 = vector.broadcast %c42_i32 : i32 to vector<16x1xi32>
    %119 = arith.addi %117, %118 : vector<16x1xi32>
    %120 = vector.broadcast %119 : vector<16x1xi32> to vector<16x128xi32>
    %121 = arith.cmpi eq, %3, %120 : vector<16x128xi32>
    %122 = arith.extui %121 : vector<16x128xi1> to vector<16x128xi32>
    %123 = arith.sitofp %122 : vector<16x128xi32> to vector<16x128xf32>
    %124 = arith.addf %116, %123 : vector<16x128xf32>
    %125 = vector.extract_strided_slice %2 {offsets = [0, 15], sizes = [16, 1], strides = [1, 1]} : vector<16x40xi32> to vector<16x1xi32>
    %c45_i32 = arith.constant 45 : i32
    %126 = vector.broadcast %c45_i32 : i32 to vector<16x1xi32>
    %127 = arith.addi %125, %126 : vector<16x1xi32>
    %128 = vector.broadcast %127 : vector<16x1xi32> to vector<16x128xi32>
    %129 = arith.cmpi eq, %3, %128 : vector<16x128xi32>
    %130 = arith.extui %129 : vector<16x128xi1> to vector<16x128xi32>
    %131 = arith.sitofp %130 : vector<16x128xi32> to vector<16x128xf32>
    %132 = arith.addf %124, %131 : vector<16x128xf32>
    %133 = vector.extract_strided_slice %2 {offsets = [0, 16], sizes = [16, 1], strides = [1, 1]} : vector<16x40xi32> to vector<16x1xi32>
    %c48_i32 = arith.constant 48 : i32
    %134 = vector.broadcast %c48_i32 : i32 to vector<16x1xi32>
    %135 = arith.addi %133, %134 : vector<16x1xi32>
    %136 = vector.broadcast %135 : vector<16x1xi32> to vector<16x128xi32>
    %137 = arith.cmpi eq, %3, %136 : vector<16x128xi32>
    %138 = arith.extui %137 : vector<16x128xi1> to vector<16x128xi32>
    %139 = arith.sitofp %138 : vector<16x128xi32> to vector<16x128xf32>
    %140 = arith.addf %132, %139 : vector<16x128xf32>
    %141 = vector.extract_strided_slice %2 {offsets = [0, 17], sizes = [16, 1], strides = [1, 1]} : vector<16x40xi32> to vector<16x1xi32>
    %c51_i32 = arith.constant 51 : i32
    %142 = vector.broadcast %c51_i32 : i32 to vector<16x1xi32>
    %143 = arith.addi %141, %142 : vector<16x1xi32>
    %144 = vector.broadcast %143 : vector<16x1xi32> to vector<16x128xi32>
    %145 = arith.cmpi eq, %3, %144 : vector<16x128xi32>
    %146 = arith.extui %145 : vector<16x128xi1> to vector<16x128xi32>
    %147 = arith.sitofp %146 : vector<16x128xi32> to vector<16x128xf32>
    %148 = arith.addf %140, %147 : vector<16x128xf32>
    %149 = vector.extract_strided_slice %2 {offsets = [0, 18], sizes = [16, 1], strides = [1, 1]} : vector<16x40xi32> to vector<16x1xi32>
    %c54_i32 = arith.constant 54 : i32
    %150 = vector.broadcast %c54_i32 : i32 to vector<16x1xi32>
    %151 = arith.addi %149, %150 : vector<16x1xi32>
    %152 = vector.broadcast %151 : vector<16x1xi32> to vector<16x128xi32>
    %153 = arith.cmpi eq, %3, %152 : vector<16x128xi32>
    %154 = arith.extui %153 : vector<16x128xi1> to vector<16x128xi32>
    %155 = arith.sitofp %154 : vector<16x128xi32> to vector<16x128xf32>
    %156 = arith.addf %148, %155 : vector<16x128xf32>
    %157 = vector.extract_strided_slice %2 {offsets = [0, 19], sizes = [16, 1], strides = [1, 1]} : vector<16x40xi32> to vector<16x1xi32>
    %c57_i32 = arith.constant 57 : i32
    %158 = vector.broadcast %c57_i32 : i32 to vector<16x1xi32>
    %159 = arith.addi %157, %158 : vector<16x1xi32>
    %160 = vector.broadcast %159 : vector<16x1xi32> to vector<16x128xi32>
    %161 = arith.cmpi eq, %3, %160 : vector<16x128xi32>
    %162 = arith.extui %161 : vector<16x128xi1> to vector<16x128xi32>
    %163 = arith.sitofp %162 : vector<16x128xi32> to vector<16x128xf32>
    %164 = arith.addf %156, %163 : vector<16x128xf32>
    %165 = vector.extract_strided_slice %2 {offsets = [0, 20], sizes = [16, 1], strides = [1, 1]} : vector<16x40xi32> to vector<16x1xi32>
    %c60_i32 = arith.constant 60 : i32
    %166 = vector.broadcast %c60_i32 : i32 to vector<16x1xi32>
    %167 = arith.addi %165, %166 : vector<16x1xi32>
    %168 = vector.broadcast %167 : vector<16x1xi32> to vector<16x128xi32>
    %169 = arith.cmpi eq, %3, %168 : vector<16x128xi32>
    %170 = arith.extui %169 : vector<16x128xi1> to vector<16x128xi32>
    %171 = arith.sitofp %170 : vector<16x128xi32> to vector<16x128xf32>
    %172 = arith.addf %164, %171 : vector<16x128xf32>
    %173 = vector.extract_strided_slice %2 {offsets = [0, 21], sizes = [16, 1], strides = [1, 1]} : vector<16x40xi32> to vector<16x1xi32>
    %c63_i32 = arith.constant 63 : i32
    %174 = vector.broadcast %c63_i32 : i32 to vector<16x1xi32>
    %175 = arith.addi %173, %174 : vector<16x1xi32>
    %176 = vector.broadcast %175 : vector<16x1xi32> to vector<16x128xi32>
    %177 = arith.cmpi eq, %3, %176 : vector<16x128xi32>
    %178 = arith.extui %177 : vector<16x128xi1> to vector<16x128xi32>
    %179 = arith.sitofp %178 : vector<16x128xi32> to vector<16x128xf32>
    %180 = arith.addf %172, %179 : vector<16x128xf32>
    %181 = vector.extract_strided_slice %2 {offsets = [0, 22], sizes = [16, 1], strides = [1, 1]} : vector<16x40xi32> to vector<16x1xi32>
    %c66_i32 = arith.constant 66 : i32
    %182 = vector.broadcast %c66_i32 : i32 to vector<16x1xi32>
    %183 = arith.addi %181, %182 : vector<16x1xi32>
    %184 = vector.broadcast %183 : vector<16x1xi32> to vector<16x128xi32>
    %185 = arith.cmpi eq, %3, %184 : vector<16x128xi32>
    %186 = arith.extui %185 : vector<16x128xi1> to vector<16x128xi32>
    %187 = arith.sitofp %186 : vector<16x128xi32> to vector<16x128xf32>
    %188 = arith.addf %180, %187 : vector<16x128xf32>
    %189 = vector.extract_strided_slice %2 {offsets = [0, 23], sizes = [16, 1], strides = [1, 1]} : vector<16x40xi32> to vector<16x1xi32>
    %c69_i32 = arith.constant 69 : i32
    %190 = vector.broadcast %c69_i32 : i32 to vector<16x1xi32>
    %191 = arith.addi %189, %190 : vector<16x1xi32>
    %192 = vector.broadcast %191 : vector<16x1xi32> to vector<16x128xi32>
    %193 = arith.cmpi eq, %3, %192 : vector<16x128xi32>
    %194 = arith.extui %193 : vector<16x128xi1> to vector<16x128xi32>
    %195 = arith.sitofp %194 : vector<16x128xi32> to vector<16x128xf32>
    %196 = arith.addf %188, %195 : vector<16x128xf32>
    %197 = vector.extract_strided_slice %2 {offsets = [0, 24], sizes = [16, 1], strides = [1, 1]} : vector<16x40xi32> to vector<16x1xi32>
    %c72_i32 = arith.constant 72 : i32
    %198 = vector.broadcast %c72_i32 : i32 to vector<16x1xi32>
    %199 = arith.addi %197, %198 : vector<16x1xi32>
    %200 = vector.broadcast %199 : vector<16x1xi32> to vector<16x128xi32>
    %201 = arith.cmpi eq, %3, %200 : vector<16x128xi32>
    %202 = arith.extui %201 : vector<16x128xi1> to vector<16x128xi32>
    %203 = arith.sitofp %202 : vector<16x128xi32> to vector<16x128xf32>
    %204 = arith.addf %196, %203 : vector<16x128xf32>
    %205 = vector.extract_strided_slice %2 {offsets = [0, 25], sizes = [16, 1], strides = [1, 1]} : vector<16x40xi32> to vector<16x1xi32>
    %c75_i32 = arith.constant 75 : i32
    %206 = vector.broadcast %c75_i32 : i32 to vector<16x1xi32>
    %207 = arith.addi %205, %206 : vector<16x1xi32>
    %208 = vector.broadcast %207 : vector<16x1xi32> to vector<16x128xi32>
    %209 = arith.cmpi eq, %3, %208 : vector<16x128xi32>
    %210 = arith.extui %209 : vector<16x128xi1> to vector<16x128xi32>
    %211 = arith.sitofp %210 : vector<16x128xi32> to vector<16x128xf32>
    %212 = arith.addf %204, %211 : vector<16x128xf32>
    %213 = vector.extract_strided_slice %2 {offsets = [0, 26], sizes = [16, 1], strides = [1, 1]} : vector<16x40xi32> to vector<16x1xi32>
    %c78_i32 = arith.constant 78 : i32
    %214 = vector.broadcast %c78_i32 : i32 to vector<16x1xi32>
    %215 = arith.addi %213, %214 : vector<16x1xi32>
    %216 = vector.broadcast %215 : vector<16x1xi32> to vector<16x128xi32>
    %217 = arith.cmpi eq, %3, %216 : vector<16x128xi32>
    %218 = arith.extui %217 : vector<16x128xi1> to vector<16x128xi32>
    %219 = arith.sitofp %218 : vector<16x128xi32> to vector<16x128xf32>
    %220 = arith.addf %212, %219 : vector<16x128xf32>
    %221 = vector.extract_strided_slice %2 {offsets = [0, 27], sizes = [16, 1], strides = [1, 1]} : vector<16x40xi32> to vector<16x1xi32>
    %c81_i32 = arith.constant 81 : i32
    %222 = vector.broadcast %c81_i32 : i32 to vector<16x1xi32>
    %223 = arith.addi %221, %222 : vector<16x1xi32>
    %224 = vector.broadcast %223 : vector<16x1xi32> to vector<16x128xi32>
    %225 = arith.cmpi eq, %3, %224 : vector<16x128xi32>
    %226 = arith.extui %225 : vector<16x128xi1> to vector<16x128xi32>
    %227 = arith.sitofp %226 : vector<16x128xi32> to vector<16x128xf32>
    %228 = arith.addf %220, %227 : vector<16x128xf32>
    %229 = vector.extract_strided_slice %2 {offsets = [0, 28], sizes = [16, 1], strides = [1, 1]} : vector<16x40xi32> to vector<16x1xi32>
    %c84_i32 = arith.constant 84 : i32
    %230 = vector.broadcast %c84_i32 : i32 to vector<16x1xi32>
    %231 = arith.addi %229, %230 : vector<16x1xi32>
    %232 = vector.broadcast %231 : vector<16x1xi32> to vector<16x128xi32>
    %233 = arith.cmpi eq, %3, %232 : vector<16x128xi32>
    %234 = arith.extui %233 : vector<16x128xi1> to vector<16x128xi32>
    %235 = arith.sitofp %234 : vector<16x128xi32> to vector<16x128xf32>
    %236 = arith.addf %228, %235 : vector<16x128xf32>
    %237 = vector.extract_strided_slice %2 {offsets = [0, 29], sizes = [16, 1], strides = [1, 1]} : vector<16x40xi32> to vector<16x1xi32>
    %c87_i32 = arith.constant 87 : i32
    %238 = vector.broadcast %c87_i32 : i32 to vector<16x1xi32>
    %239 = arith.addi %237, %238 : vector<16x1xi32>
    %240 = vector.broadcast %239 : vector<16x1xi32> to vector<16x128xi32>
    %241 = arith.cmpi eq, %3, %240 : vector<16x128xi32>
    %242 = arith.extui %241 : vector<16x128xi1> to vector<16x128xi32>
    %243 = arith.sitofp %242 : vector<16x128xi32> to vector<16x128xf32>
    %244 = arith.addf %236, %243 : vector<16x128xf32>
    %245 = vector.extract_strided_slice %2 {offsets = [0, 30], sizes = [16, 1], strides = [1, 1]} : vector<16x40xi32> to vector<16x1xi32>
    %c90_i32 = arith.constant 90 : i32
    %246 = vector.broadcast %c90_i32 : i32 to vector<16x1xi32>
    %247 = arith.addi %245, %246 : vector<16x1xi32>
    %248 = vector.broadcast %247 : vector<16x1xi32> to vector<16x128xi32>
    %249 = arith.cmpi eq, %3, %248 : vector<16x128xi32>
    %250 = arith.extui %249 : vector<16x128xi1> to vector<16x128xi32>
    %251 = arith.sitofp %250 : vector<16x128xi32> to vector<16x128xf32>
    %252 = arith.addf %244, %251 : vector<16x128xf32>
    %253 = vector.extract_strided_slice %2 {offsets = [0, 31], sizes = [16, 1], strides = [1, 1]} : vector<16x40xi32> to vector<16x1xi32>
    %c93_i32 = arith.constant 93 : i32
    %254 = vector.broadcast %c93_i32 : i32 to vector<16x1xi32>
    %255 = arith.addi %253, %254 : vector<16x1xi32>
    %256 = vector.broadcast %255 : vector<16x1xi32> to vector<16x128xi32>
    %257 = arith.cmpi eq, %3, %256 : vector<16x128xi32>
    %258 = arith.extui %257 : vector<16x128xi1> to vector<16x128xi32>
    %259 = arith.sitofp %258 : vector<16x128xi32> to vector<16x128xf32>
    %260 = arith.addf %252, %259 : vector<16x128xf32>
    %261 = vector.extract_strided_slice %2 {offsets = [0, 32], sizes = [16, 1], strides = [1, 1]} : vector<16x40xi32> to vector<16x1xi32>
    %c96_i32 = arith.constant 96 : i32
    %262 = vector.broadcast %c96_i32 : i32 to vector<16x1xi32>
    %263 = arith.addi %261, %262 : vector<16x1xi32>
    %264 = vector.broadcast %263 : vector<16x1xi32> to vector<16x128xi32>
    %265 = arith.cmpi eq, %3, %264 : vector<16x128xi32>
    %266 = arith.extui %265 : vector<16x128xi1> to vector<16x128xi32>
    %267 = arith.sitofp %266 : vector<16x128xi32> to vector<16x128xf32>
    %268 = arith.addf %260, %267 : vector<16x128xf32>
    %269 = vector.extract_strided_slice %2 {offsets = [0, 33], sizes = [16, 1], strides = [1, 1]} : vector<16x40xi32> to vector<16x1xi32>
    %c99_i32 = arith.constant 99 : i32
    %270 = vector.broadcast %c99_i32 : i32 to vector<16x1xi32>
    %271 = arith.addi %269, %270 : vector<16x1xi32>
    %272 = vector.broadcast %271 : vector<16x1xi32> to vector<16x128xi32>
    %273 = arith.cmpi eq, %3, %272 : vector<16x128xi32>
    %274 = arith.extui %273 : vector<16x128xi1> to vector<16x128xi32>
    %275 = arith.sitofp %274 : vector<16x128xi32> to vector<16x128xf32>
    %276 = arith.addf %268, %275 : vector<16x128xf32>
    %277 = vector.extract_strided_slice %2 {offsets = [0, 34], sizes = [16, 1], strides = [1, 1]} : vector<16x40xi32> to vector<16x1xi32>
    %c102_i32 = arith.constant 102 : i32
    %278 = vector.broadcast %c102_i32 : i32 to vector<16x1xi32>
    %279 = arith.addi %277, %278 : vector<16x1xi32>
    %280 = vector.broadcast %279 : vector<16x1xi32> to vector<16x128xi32>
    %281 = arith.cmpi eq, %3, %280 : vector<16x128xi32>
    %282 = arith.extui %281 : vector<16x128xi1> to vector<16x128xi32>
    %283 = arith.sitofp %282 : vector<16x128xi32> to vector<16x128xf32>
    %284 = arith.addf %276, %283 : vector<16x128xf32>
    %285 = vector.extract_strided_slice %2 {offsets = [0, 35], sizes = [16, 1], strides = [1, 1]} : vector<16x40xi32> to vector<16x1xi32>
    %c105_i32 = arith.constant 105 : i32
    %286 = vector.broadcast %c105_i32 : i32 to vector<16x1xi32>
    %287 = arith.addi %285, %286 : vector<16x1xi32>
    %288 = vector.broadcast %287 : vector<16x1xi32> to vector<16x128xi32>
    %289 = arith.cmpi eq, %3, %288 : vector<16x128xi32>
    %290 = arith.extui %289 : vector<16x128xi1> to vector<16x128xi32>
    %291 = arith.sitofp %290 : vector<16x128xi32> to vector<16x128xf32>
    %292 = arith.addf %284, %291 : vector<16x128xf32>
    %293 = vector.extract_strided_slice %2 {offsets = [0, 36], sizes = [16, 1], strides = [1, 1]} : vector<16x40xi32> to vector<16x1xi32>
    %c108_i32 = arith.constant 108 : i32
    %294 = vector.broadcast %c108_i32 : i32 to vector<16x1xi32>
    %295 = arith.addi %293, %294 : vector<16x1xi32>
    %296 = vector.broadcast %295 : vector<16x1xi32> to vector<16x128xi32>
    %297 = arith.cmpi eq, %3, %296 : vector<16x128xi32>
    %298 = arith.extui %297 : vector<16x128xi1> to vector<16x128xi32>
    %299 = arith.sitofp %298 : vector<16x128xi32> to vector<16x128xf32>
    %300 = arith.addf %292, %299 : vector<16x128xf32>
    %301 = vector.extract_strided_slice %2 {offsets = [0, 37], sizes = [16, 1], strides = [1, 1]} : vector<16x40xi32> to vector<16x1xi32>
    %c111_i32 = arith.constant 111 : i32
    %302 = vector.broadcast %c111_i32 : i32 to vector<16x1xi32>
    %303 = arith.addi %301, %302 : vector<16x1xi32>
    %304 = vector.broadcast %303 : vector<16x1xi32> to vector<16x128xi32>
    %305 = arith.cmpi eq, %3, %304 : vector<16x128xi32>
    %306 = arith.extui %305 : vector<16x128xi1> to vector<16x128xi32>
    %307 = arith.sitofp %306 : vector<16x128xi32> to vector<16x128xf32>
    %308 = arith.addf %300, %307 : vector<16x128xf32>
    %309 = vector.extract_strided_slice %2 {offsets = [0, 38], sizes = [16, 1], strides = [1, 1]} : vector<16x40xi32> to vector<16x1xi32>
    %c114_i32 = arith.constant 114 : i32
    %310 = vector.broadcast %c114_i32 : i32 to vector<16x1xi32>
    %311 = arith.addi %309, %310 : vector<16x1xi32>
    %312 = vector.broadcast %311 : vector<16x1xi32> to vector<16x128xi32>
    %313 = arith.cmpi eq, %3, %312 : vector<16x128xi32>
    %314 = arith.extui %313 : vector<16x128xi1> to vector<16x128xi32>
    %315 = arith.sitofp %314 : vector<16x128xi32> to vector<16x128xf32>
    %316 = arith.addf %308, %315 : vector<16x128xf32>
    %317 = vector.extract_strided_slice %2 {offsets = [0, 39], sizes = [16, 1], strides = [1, 1]} : vector<16x40xi32> to vector<16x1xi32>
    %c117_i32 = arith.constant 117 : i32
    %318 = vector.broadcast %c117_i32 : i32 to vector<16x1xi32>
    %319 = arith.addi %317, %318 : vector<16x1xi32>
    %320 = vector.broadcast %319 : vector<16x1xi32> to vector<16x128xi32>
    %321 = arith.cmpi eq, %3, %320 : vector<16x128xi32>
    %322 = arith.extui %321 : vector<16x128xi1> to vector<16x128xi32>
    %323 = arith.sitofp %322 : vector<16x128xi32> to vector<16x128xf32>
    %324 = arith.addf %316, %323 : vector<16x128xf32>
    %325 = arith.truncf %324 : vector<16x128xf32> to vector<16x128xbf16>
    %c0_1 = arith.constant 0 : index
    %c0_2 = arith.constant 0 : index
    %326 = vector.load %arg3[%c0_1, %c0_2] : memref<128x512xbf16, #tpu.memory_space<vmem>>, vector<128x512xbf16>
    %cst_3 = arith.constant dense<0.000000e+00> : vector<16x512xf32>
    %327 = tpu.matmul %325, %326, %cst_3 {dimension_numbers = #tpu.dot_dimension_numbers<[1], [0], [0], [1], [0, 0, 1, 1], [], []>} : vector<16x128xbf16>, vector<128x512xbf16>, vector<16x512xf32> -> vector<16x512xf32>
    %c0_4 = arith.constant 0 : index
    %c0_5 = arith.constant 0 : index
    %328 = vector.load %arg4[%c0_4, %c0_5] : memref<1x512xf32, #tpu.memory_space<vmem>>, vector<1x512xf32>
    %329 = vector.broadcast %328 : vector<1x512xf32> to vector<16x512xf32>
    %330 = arith.addf %327, %329 : vector<16x512xf32>
    %331 = arith.negf %330 : vector<16x512xf32>
    %332 = math.exp %331 : vector<16x512xf32>
    %cst_6 = arith.constant 1.000000e+00 : f32
    %333 = vector.broadcast %cst_6 : f32 to vector<16x512xf32>
    %334 = arith.addf %333, %332 : vector<16x512xf32>
    %335 = arith.divf %333, %334 : vector<16x512xf32>
    %336 = arith.mulf %330, %335 : vector<16x512xf32>
    %337 = arith.truncf %336 : vector<16x512xf32> to vector<16x512xbf16>
    %c0_7 = arith.constant 0 : index
    %c0_8 = arith.constant 0 : index
    %338 = vector.load %arg5[%c0_7, %c0_8] : memref<512x512xbf16, #tpu.memory_space<vmem>>, vector<512x512xbf16>
    %cst_9 = arith.constant dense<0.000000e+00> : vector<16x512xf32>
    %339 = tpu.matmul %337, %338, %cst_9 {dimension_numbers = #tpu.dot_dimension_numbers<[1], [0], [0], [1], [0, 0, 1, 1], [], []>} : vector<16x512xbf16>, vector<512x512xbf16>, vector<16x512xf32> -> vector<16x512xf32>
    %c0_10 = arith.constant 0 : index
    %c0_11 = arith.constant 0 : index
    %340 = vector.load %arg6[%c0_10, %c0_11] : memref<1x512xf32, #tpu.memory_space<vmem>>, vector<1x512xf32>
    %341 = vector.broadcast %340 : vector<1x512xf32> to vector<16x512xf32>
    %342 = arith.addf %339, %341 : vector<16x512xf32>
    %c0_12 = arith.constant 0 : index
    %c0_13 = arith.constant 0 : index
    %343 = vector.load %arg7[%c0_12, %c0_13] : memref<16x512xf32, #tpu.memory_space<vmem>>, vector<16x512xf32>
    tpu.vector_store %arg7[%c0_12, %c0_13], %342 {strides = array<i32>} : memref<16x512xf32, #tpu.memory_space<vmem>>, vector<16x512xf32>,
    return
  }
  func.func @transform_0(%arg0: i32, %arg1: memref<1xi32, #tpu.memory_space<smem>>) -> (i32, i32) {
    %c0_i32 = arith.constant 0 : i32
    %c0_i32_0 = arith.constant 0 : i32
    return %arg0, %c0_i32 : i32, i32
  }
  func.func @transform_1(%arg0: i32, %arg1: memref<1xi32, #tpu.memory_space<smem>>) -> (i32, i32) {
    %c0_i32 = arith.constant 0 : i32
    %c0_i32_0 = arith.constant 0 : i32
    %c0_i32_1 = arith.constant 0 : i32
    return %c0_i32, %c0_i32_0 : i32, i32
  }
  func.func @transform_2(%arg0: i32, %arg1: memref<1xi32, #tpu.memory_space<smem>>) -> (i32, i32) {
    %c0_i32 = arith.constant 0 : i32
    %c0_i32_0 = arith.constant 0 : i32
    %c0_i32_1 = arith.constant 0 : i32
    return %c0_i32, %c0_i32_0 : i32, i32
  }
  func.func @transform_3(%arg0: i32, %arg1: memref<1xi32, #tpu.memory_space<smem>>) -> (i32, i32) {
    %c0_i32 = arith.constant 0 : i32
    %c0_i32_0 = arith.constant 0 : i32
    %c0_i32_1 = arith.constant 0 : i32
    return %c0_i32, %c0_i32_0 : i32, i32
  }
  func.func @transform_4(%arg0: i32, %arg1: memref<1xi32, #tpu.memory_space<smem>>) -> (i32, i32) {
    %c0_i32 = arith.constant 0 : i32
    %c0_i32_0 = arith.constant 0 : i32
    %c0_i32_1 = arith.constant 0 : i32
    return %c0_i32, %c0_i32_0 : i32, i32
  }
  func.func @transform_5(%arg0: i32, %arg1: memref<1xi32, #tpu.memory_space<smem>>) -> (i32, i32) {
    %c0_i32 = arith.constant 0 : i32
    %c0_i32_0 = arith.constant 0 : i32
    return %arg0, %c0_i32 : i32, i32
  }
}

</mosaic_0001>

<llo_original>
// kernel: tpu_custom_call.1
$region0: #{tpu_custom_call.1}
  #allocation0 [shape = 'u32[]', space=smem, size = 0x4, offset = 0x4, fixed_abs, tag = 'smem constant byte address 0x4 - core index']
  #allocation1 [shape = 'u32[144,128]{1,0:T(1,128)}', space=vmem, size = 0x12000, scoped, tag = 'internal scratch']
  #allocation2 [shape = 's32[1]{0}', space=sflag, size = 0x4, scoped, tag = 'scoped memory for tpu_custom_call.1']
  #allocation3 [shape = 's32[1]{0:T(128)S(6)}', space=smem, size = 0x200, scoped, tag = 'prefetched SMEM operand 0']
  %s0 = inlined_call_operand.<no memory space> [shape: s32[1], index: 0, kind: input, shape index: {}]
  %s1 = inlined_call_operand.hbm [shape: s32[32,40], index: 1, kind: input, shape index: {}]
  %s2 = inlined_call_operand.hbm [shape: bf16[128,512], index: 2, kind: input, shape index: {}]
  %s3 = inlined_call_operand.vmem [shape: f32[1,512], index: 3, kind: input, shape index: {}]
  %s4 = inlined_call_operand.hbm [shape: bf16[512,512], index: 4, kind: input, shape index: {}]
  %s5 = inlined_call_operand.vmem [shape: f32[1,512], index: 5, kind: input, shape index: {}]
  %s6 = inlined_call_operand.hbm [shape: f32[32,512], index: 6, kind: output, shape index: {}]
  %s7 = sld [smem:[#allocation0]]
  $region65: #{tpu_custom_call.1} parent=0
    _
  %s9 = ssub.s32 1, %s7
  %s10 = scalar_select 0, %s9, %s7
  %11 = sst [smem:[#allocation3]] %s0
  $region1: #{tpu_custom_call.1} parent=0
    #allocation4 [shape = 'u8[16384]{0}', space=vmem, size = 0x4000, scoped, tag = 'input window, operand 1']
    #allocation5 [shape = 's32[2]{0}', space=sflag, size = 0x8, scoped, tag = 'scoped memory for tpu_custom_call.1']
    #allocation6 [shape = 's32[2]{0}', space=sflag, size = 0x8, scoped, tag = 'scoped memory for tpu_custom_call.1']
    #allocation7 [shape = 'u8[131072]{0}', space=vmem, size = 0x20000, scoped, tag = 'input window, operand 2, single buffered']
    #allocation8 [shape = 's32[1]{0}', space=sflag, size = 0x4, scoped, tag = 'scoped memory for tpu_custom_call.1']
    #allocation9 [shape = 'u8[524288]{0}', space=vmem, size = 0x80000, scoped, tag = 'input window, operand 4, single buffered']
    #allocation10 [shape = 'u8[65536]{0}', space=vmem, size = 0x10000, scoped, tag = 'output window, operand 0']
    %12 = vsyncpa [#allocation5], 0
    %s13 = scalar_lea.sflag [#allocation5], 1
    %14 = vsyncpa %s13, 0
    %15 = vsyncpa [#allocation8], 0
    %16 = vsyncpa [#allocation6], 0
    %s17 = scalar_lea.sflag [#allocation6], 1
    %18 = vsyncpa %s17, 0
    loop: start=0, step=1, limit=4
    $region2: #{tpu_custom_call.1} parent=1 // loop_pre_header
      _
    $region3: #{tpu_custom_call.1} parent=1 // loop_header
      %s20 = sphi 0, %s24
      %p21 = scmp.ge.s32.totalorder %s20, 4
      %s30 = sphi 0, %s32
      %s33 = sphi 0, %s30
      %s34 = sphi 0, %s33
      %s50 = sphi 0, %s34
      %s54 = sphi 0, %s54
      %s56 = sphi 0, %s54
      %s57 = sphi 0, %s56
      %s71 = sphi 0, %s57
      %s75 = sphi 0, %s75
      %s77 = sphi 0, %s75
      %s78 = sphi 0, %s77
      %s92 = sphi 0, %s78
      %s96 = sphi 0, %s96
      %s98 = sphi 0, %s96
      %s99 = sphi 0, %s98
      %s113 = sphi 0, %s99
      %s117 = sphi 0, %s117
      %s119 = sphi 0, %s117
      %s120 = sphi 0, %s119
      %s134 = sphi 0, %s120
      %s140 = sphi 0, %s142
      %s143 = sphi 0, %s140
      %s144 = sphi 0, %s143
      %s160 = sphi 0, %s144
    $region4: #{tpu_custom_call.1} parent=1 // loop_header_branch
      %23 = sbr.rel (%p21) target = $region8
    $region5: #{tpu_custom_call.1} parent=1 // loop_body
      %s25 = ssub.s32 %s20, 1
      %s26 = ssub.s32 %s20, 2
      %s27 = sadd.s32 %s20, 1
      %s28 = ssub.s32 %s20, %s27
      %p29 = scmp.eq.s32.totalorder %s28, 0
      %s31 = sadd.s32 %s30, 1
      %s32 = scalar_select %p29, %s30, %s31
      %p35 = pneg %p29
      %p36 = scmp.eq.s32.totalorder %s20, 1
      %p37 = por %p35, %p36
      %p38 = scmp.ne.s32.totalorder %s30, %s33
      %p39 = scmp.eq.s32.totalorder %s20, 0
      %p40 = por %p38, %p39
      %p41 = scmp.ne.s32.totalorder %s30, %s33
      %p42 = scmp.eq.s32.totalorder %s25, 1
      %p43 = por %p41, %p42
      %p44 = scmp.ne.s32.totalorder %s33, %s34
      %p45 = scmp.eq.s32.totalorder %s25, 0
      %p46 = por %p44, %p45
      %p47 = scmp.ne.s32.totalorder %s33, %s34
      %p48 = scmp.eq.s32.totalorder %s26, 1
      %p49 = por %p47, %p48
      %p51 = scmp.ne.s32.totalorder %s34, %s50
      %p52 = scmp.eq.s32.totalorder %s26, 0
      %p53 = por %p51, %p52
      %s55 = sadd.s32 %s54, 1
      %p58 = scmp.eq.s32.totalorder %s20, 1
      %p59 = scmp.ne.s32.totalorder %s54, %s56
      %p60 = scmp.eq.s32.totalorder %s20, 0
      %p61 = por %p59, %p60
      %p62 = scmp.ne.s32.totalorder %s54, %s56
      %p63 = scmp.eq.s32.totalorder %s25, 1
      %p64 = por %p62, %p63
      %p65 = scmp.ne.s32.totalorder %s56, %s57
      %p66 = scmp.eq.s32.totalorder %s25, 0
      %p67 = por %p65, %p66
      %p68 = scmp.ne.s32.totalorder %s56, %s57
      %p69 = scmp.eq.s32.totalorder %s26, 1
      %p70 = por %p68, %p69
      %p72 = scmp.ne.s32.totalorder %s57, %s71
      %p73 = scmp.eq.s32.totalorder %s26, 0
      %p74 = por %p72, %p73
      %s76 = sadd.s32 %s75, 1
      %p79 = scmp.eq.s32.totalorder %s20, 1
      %p80 = scmp.ne.s32.totalorder %s75, %s77
      %p81 = scmp.eq.s32.totalorder %s20, 0
      %p82 = por %p80, %p81
      %p83 = scmp.ne.s32.totalorder %s75, %s77
      %p84 = scmp.eq.s32.totalorder %s25, 1
      %p85 = por %p83, %p84
      %p86 = scmp.ne.s32.totalorder %s77, %s78
      %p87 = scmp.eq.s32.totalorder %s25, 0
      %p88 = por %p86, %p87
      %p89 = scmp.ne.s32.totalorder %s77, %s78
      %p90 = scmp.eq.s32.totalorder %s26, 1
      %p91 = por %p89, %p90
      %p93 = scmp.ne.s32.totalorder %s78, %s92
      %p94 = scmp.eq.s32.totalorder %s26, 0
      %p95 = por %p93, %p94
      %s97 = sadd.s32 %s96, 1
      %p100 = scmp.eq.s32.totalorder %s20, 1
      %p101 = scmp.ne.s32.totalorder %s96, %s98
      %p102 = scmp.eq.s32.totalorder %s20, 0
      %p103 = por %p101, %p102
      %p104 = scmp.ne.s32.totalorder %s96, %s98
      %p105 = scmp.eq.s32.totalorder %s25, 1
      %p106 = por %p104, %p105
      %p107 = scmp.ne.s32.totalorder %s98, %s99
      %p108 = scmp.eq.s32.totalorder %s25, 0
      %p109 = por %p107, %p108
      %p110 = scmp.ne.s32.totalorder %s98, %s99
      %p111 = scmp.eq.s32.totalorder %s26, 1
      %p112 = por %p110, %p111
      %p114 = scmp.ne.s32.totalorder %s99, %s113
      %p115 = scmp.eq.s32.totalorder %s26, 0
      %p116 = por %p114, %p115
      %s118 = sadd.s32 %s117, 1
      %p121 = scmp.eq.s32.totalorder %s20, 1
      %p122 = scmp.ne.s32.totalorder %s117, %s119
      %p123 = scmp.eq.s32.totalorder %s20, 0
      %p124 = por %p122, %p123
      %p125 = scmp.ne.s32.totalorder %s117, %s119
      %p126 = scmp.eq.s32.totalorder %s25, 1
      %p127 = por %p125, %p126
      %p128 = scmp.ne.s32.totalorder %s119, %s120
      %p129 = scmp.eq.s32.totalorder %s25, 0
      %p130 = por %p128, %p129
      %p131 = scmp.ne.s32.totalorder %s119, %s120
      %p132 = scmp.eq.s32.totalorder %s26, 1
      %p133 = por %p131, %p132
      %p135 = scmp.ne.s32.totalorder %s120, %s134
      %p136 = scmp.eq.s32.totalorder %s26, 0
      %p137 = por %p135, %p136
      %s138 = ssub.s32 %s20, %s27
      %p139 = scmp.eq.s32.totalorder %s138, 0
      %s141 = sadd.s32 %s140, 1
      %s142 = scalar_select %p139, %s140, %s141
      %p145 = pneg %p139
      %p146 = scmp.eq.s32.totalorder %s20, 1
      %p147 = por %p145, %p146
      %p148 = scmp.ne.s32.totalorder %s140, %s143
      %p149 = scmp.eq.s32.totalorder %s20, 0
      %p150 = por %p148, %p149
      %p151 = scmp.ne.s32.totalorder %s140, %s143
      %p152 = scmp.eq.s32.totalorder %s25, 1
      %p153 = por %p151, %p152
      %p154 = scmp.ne.s32.totalorder %s143, %s144
      %p155 = scmp.eq.s32.totalorder %s25, 0
      %p156 = por %p154, %p155
      %p157 = scmp.ne.s32.totalorder %s143, %s144
      %p158 = scmp.eq.s32.totalorder %s26, 1
      %p159 = por %p157, %p158
      %p161 = scmp.ne.s32.totalorder %s144, %s160
      %p162 = scmp.eq.s32.totalorder %s26, 0
      %p163 = por %p161, %p162
      %p164 = scmp.le.s32.totalorder 1, %s20
      %p165 = scmp.lt.s32.totalorder %s20, 3
      %p166 = pnand %p164, %p165
      %p167 = pneg %p166
      // Predicated region
      $region9: #{tpu_custom_call.1} parent=5 // pred_check
        _
      $region10: #{tpu_custom_call.1} parent=5 // pred_check_branch
        %169 = sbr.rel (%p166) target = $region12
      $region11: #{tpu_custom_call.1} parent=5 // pred_region
        %s170 = ssub.s32 %s20, 1
        // Predicated region
        $region13: #{tpu_custom_call.1} parent=11 // pred_check
          %p171 = pneg %p67
        $region14: #{tpu_custom_call.1} parent=11 // pred_check_branch
          %173 = sbr.rel (%p171) target = $region16
        $region15: #{tpu_custom_call.1} parent=11 // pred_region
          %s175 = ssub.s32 4096, 4096
          %176 = vsyncadd [#allocation8], %s175
          %s177 = sshll.u32 [#allocation7], 4
          %s178 = int_to_ptr.vmem [resolvable:$true] %s177
          %183 = dma.hbm_to_vmem [thread:$0]  %s2, 4096, %s178, [#allocation8], 256, 256, 16
        $region16: #{tpu_custom_call.1} parent=11 // pred_fallthru
          _
        // Predicated region
        $region17: #{tpu_custom_call.1} parent=11 // pred_check
          %p184 = pneg %p88
        $region18: #{tpu_custom_call.1} parent=11 // pred_check_branch
          %186 = sbr.rel (%p184) target = $region20
        $region19: #{tpu_custom_call.1} parent=11 // pred_region
          _
        $region20: #{tpu_custom_call.1} parent=11 // pred_fallthru
          _
        // Predicated region
        $region21: #{tpu_custom_call.1} parent=11 // pred_check
          %p187 = pneg %p109
        $region22: #{tpu_custom_call.1} parent=11 // pred_check_branch
          %189 = sbr.rel (%p187) target = $region24
        $region23: #{tpu_custom_call.1} parent=11 // pred_region
          %s191 = ssub.s32 16384, 16384
          %192 = vsyncadd [#allocation8], %s191
          %s193 = sshll.u32 [#allocation9], 4
          %s194 = int_to_ptr.vmem [resolvable:$true] %s193
          %199 = dma.hbm_to_vmem [thread:$0]  %s4, 16384, %s194, [#allocation8], 256, 256, 16
        $region24: #{tpu_custom_call.1} parent=11 // pred_fallthru
          _
        // Predicated region
        $region25: #{tpu_custom_call.1} parent=11 // pred_check
          %p200 = pneg %p130
        $region26: #{tpu_custom_call.1} parent=11 // pred_check_branch
          %202 = sbr.rel (%p200) target = $region28
        $region27: #{tpu_custom_call.1} parent=11 // pred_region
          _
        $region28: #{tpu_custom_call.1} parent=11 // pred_fallthru
          _
      $region12: #{tpu_custom_call.1} parent=5 // pred_fallthru
        _
      %p203 = scmp.lt.s32.totalorder %s20, 2
      // Predicated region
      $region29: #{tpu_custom_call.1} parent=5 // pred_check
        %p204 = pneg %p203
      $region30: #{tpu_custom_call.1} parent=5 // pred_check_branch
        %206 = sbr.rel (%p204) target = $region32
      $region31: #{tpu_custom_call.1} parent=5 // pred_region
        // Predicated region
        $region33: #{tpu_custom_call.1} parent=31 // pred_check
          %p207 = pneg %p40
        $region34: #{tpu_custom_call.1} parent=31 // pred_check_branch
          %209 = sbr.rel (%p207) target = $region36
        $region35: #{tpu_custom_call.1} parent=31 // pred_region
          %s210 = sand.u32 %s30, 1
          %s211 = scalar_lea.sflag [#allocation5], %s210
          %s212 = sand.u32 %s30, 1
          %s213 = smul.addr %s212, 16
          %s214 = scalar_lea.vmem [#allocation4], %s213
          %s215 = smul.u32 2, %s20
          %s217 = ssub.s32 256, 256
          %218 = vsyncadd %s211, %s217
          %s219 = smul.addr %s215, 128
          %s220 = scalar_lea.hbm %s1, %s219
          %s221 = sshll.u32 %s214, 4
          %s222 = int_to_ptr.vmem [resolvable:$true] %s221
          %227 = dma.hbm_to_vmem [thread:$0]  %s220, 256, %s222, %s211, 128, 128, 8
        $region36: #{tpu_custom_call.1} parent=31 // pred_fallthru
          _
      $region32: #{tpu_custom_call.1} parent=5 // pred_fallthru
        _
      %p228 = scmp.le.s32.totalorder 1, %s20
      %p229 = scmp.lt.s32.totalorder %s20, 3
      %p230 = pnand %p228, %p229
      %p231 = pneg %p230
      // Predicated region
      $region37: #{tpu_custom_call.1} parent=5 // pred_check
        _
      $region38: #{tpu_custom_call.1} parent=5 // pred_check_branch
        %233 = sbr.rel (%p230) target = $region40
      $region39: #{tpu_custom_call.1} parent=5 // pred_region
        %s234 = ssub.s32 %s20, 1
        %s235 = sand.u32 %s33, 1
        %s236 = scalar_lea.sflag [#allocation5], %s235
        %s237 = sand.u32 %s33, 1
        %s238 = smul.addr %s237, 16
        %s239 = scalar_lea.vmem [#allocation4], %s238
        // Predicated region
        $region41: #{tpu_custom_call.1} parent=39 // pred_check
          %p240 = pneg %p46
        $region42: #{tpu_custom_call.1} parent=39 // pred_check_branch
          %242 = sbr.rel (%p240) target = $region44
        $region43: #{tpu_custom_call.1} parent=39 // pred_region
          %243 = dma.done %s236, 256
        $region44: #{tpu_custom_call.1} parent=39 // pred_fallthru
          _
        // Predicated region
        $region45: #{tpu_custom_call.1} parent=39 // pred_check
          %p244 = pneg %p67
        $region46: #{tpu_custom_call.1} parent=39 // pred_check_branch
          %246 = sbr.rel (%p244) target = $region48
        $region47: #{tpu_custom_call.1} parent=39 // pred_region
          %247 = dma.done [#allocation8], 4096
        $region48: #{tpu_custom_call.1} parent=39 // pred_fallthru
          _
        // Predicated region
        $region49: #{tpu_custom_call.1} parent=39 // pred_check
          %p248 = pneg %p109
        $region50: #{tpu_custom_call.1} parent=39 // pred_check_branch
          %250 = sbr.rel (%p248) target = $region52
        $region51: #{tpu_custom_call.1} parent=39 // pred_region
          %251 = dma.done [#allocation8], 16384
        $region52: #{tpu_custom_call.1} parent=39 // pred_fallthru
          _
        %s252 = sand.u32 %s33, 1
        %s253 = scalar_lea.sflag [#allocation5], %s252
        %s254 = sand.u32 %s33, 1
        %s255 = smul.addr %s254, 16
        %s256 = scalar_lea.vmem [#allocation4], %s255
        %p257 = pneg %p46
        %p258 = pneg %p43
        %p259 = pneg %p67
        %p260 = pneg %p64
        %p261 = pneg %p88
        %p262 = pneg %p85
        %p263 = pneg %p109
        %p264 = pneg %p106
        %p265 = pneg %p130
        %p266 = pneg %p127
        %p267 = pneg %p156
        %p268 = pneg %p153
        %s269 = sand.u32 %s143, 1
        %s270 = scalar_lea.sflag [#allocation6], %s269
        %s271 = sand.u32 %s143, 1
        %s272 = smul.addr %s271, 64
        %s273 = scalar_lea.vmem [#allocation10], %s272
        %s274 = smul.u32 2, %s25
        %s275 = smul.u32 2, %s25
        %v277 = vld [vmem:[%s239] sm:$0xff]
        %v278 = vld [vmem:[%s239 + $0x8] sm:$0xff]
        %v279 = vadd.s32 %v277, 1
        %v280 = vadd.s32 %v278, 1
        %v281 = vlaneseq
        %v282 = vand.u32 %v281, 127
        %283 = vset.pattern.permute.xlu0 0
        %284 = vperm.xlu0 %283, %v279
        %v285 = vpop.permute.xlu0 %284
        %286 = vset.pattern.permute.xlu0 0
        %287 = vperm.xlu0 %286, %v280
        %v288 = vpop.permute.xlu0 %287
        %vm289 = vcmp.eq.s32.totalorder %v282, %v285
        %vm290 = vcmp.eq.s32.totalorder %v282, %v288
        %v291 = vsel %vm289, 1, 0
        %v292 = vsel %vm290, 1, 0
        %v293 = vcvt.s32.f32 %v291
        %v294 = vcvt.s32.f32 %v292
        %v295 = vadd.f32 %v293, 0.0
        %v296 = vadd.f32 %v294, 0.0
        %v297 = vadd.s32 %v279, 3
        %v298 = vadd.s32 %v280, 3
        %299 = vset.pattern.permute.xlu0 1
        %300 = vperm.xlu0 %299, %v297
        %v301 = vpop.permute.xlu0 %300
        %302 = vset.pattern.permute.xlu0 1
        %303 = vperm.xlu0 %302, %v298
        %v304 = vpop.permute.xlu0 %303
        %vm305 = vcmp.eq.s32.totalorder %v282, %v301
        %vm306 = vcmp.eq.s32.totalorder %v282, %v304
        %v307 = vsel %vm305, 1, 0
        %v308 = vsel %vm306, 1, 0
        %v309 = vcvt.s32.f32 %v307
        %v310 = vcvt.s32.f32 %v308
        %v311 = vadd.f32 %v295, %v309
        %v312 = vadd.f32 %v296, %v310
        %v313 = vadd.s32 %v279, 6
        %v314 = vadd.s32 %v280, 6
        %315 = vset.pattern.permute.xlu0 2
        %316 = vperm.xlu0 %315, %v313
        %v317 = vpop.permute.xlu0 %316
        %318 = vset.pattern.permute.xlu0 2
        %319 = vperm.xlu0 %318, %v314
        %v320 = vpop.permute.xlu0 %319
        %vm321 = vcmp.eq.s32.totalorder %v282, %v317
        %vm322 = vcmp.eq.s32.totalorder %v282, %v320
        %v323 = vsel %vm321, 1, 0
        %v324 = vsel %vm322, 1, 0
        %v325 = vcvt.s32.f32 %v323
        %v326 = vcvt.s32.f32 %v324
        %v327 = vadd.f32 %v311, %v325
        %v328 = vadd.f32 %v312, %v326
        %v329 = vadd.s32 %v279, 9
        %v330 = vadd.s32 %v280, 9
        %331 = vset.pattern.permute.xlu0 3
        %332 = vperm.xlu0 %331, %v329
        %v333 = vpop.permute.xlu0 %332
        %334 = vset.pattern.permute.xlu0 3
        %335 = vperm.xlu0 %334, %v330
        %v336 = vpop.permute.xlu0 %335
        %vm337 = vcmp.eq.s32.totalorder %v282, %v333
        %vm338 = vcmp.eq.s32.totalorder %v282, %v336
        %v339 = vsel %vm337, 1, 0
        %v340 = vsel %vm338, 1, 0
        %v341 = vcvt.s32.f32 %v339
        %v342 = vcvt.s32.f32 %v340
        %v343 = vadd.f32 %v327, %v341
        %v344 = vadd.f32 %v328, %v342
        %v345 = vadd.s32 %v279, 12
        %v346 = vadd.s32 %v280, 12
        %347 = vset.pattern.permute.xlu0 4
        %348 = vperm.xlu0 %347, %v345
        %v349 = vpop.permute.xlu0 %348
        %350 = vset.pattern.permute.xlu0 4
        %351 = vperm.xlu0 %350, %v346
        %v352 = vpop.permute.xlu0 %351
        %vm353 = vcmp.eq.s32.totalorder %v282, %v349
        %vm354 = vcmp.eq.s32.totalorder %v282, %v352
        %v355 = vsel %vm353, 1, 0
        %v356 = vsel %vm354, 1, 0
        %v357 = vcvt.s32.f32 %v355
        %v358 = vcvt.s32.f32 %v356
        %v359 = vadd.f32 %v343, %v357
        %v360 = vadd.f32 %v344, %v358
        %v361 = vadd.s32 %v279, 15
        %v362 = vadd.s32 %v280, 15
        %363 = vset.pattern.permute.xlu0 5
        %364 = vperm.xlu0 %363, %v361
        %v365 = vpop.permute.xlu0 %364
        %366 = vset.pattern.permute.xlu0 5
        %367 = vperm.xlu0 %366, %v362
        %v368 = vpop.permute.xlu0 %367
        %vm369 = vcmp.eq.s32.totalorder %v282, %v365
        %vm370 = vcmp.eq.s32.totalorder %v282, %v368
        %v371 = vsel %vm369, 1, 0
        %v372 = vsel %vm370, 1, 0
        %v373 = vcvt.s32.f32 %v371
        %v374 = vcvt.s32.f32 %v372
        %v375 = vadd.f32 %v359, %v373
        %v376 = vadd.f32 %v360, %v374
        %v377 = vadd.s32 %v279, 18
        %v378 = vadd.s32 %v280, 18
        %379 = vset.pattern.permute.xlu0 6
        %380 = vperm.xlu0 %379, %v377
        %v381 = vpop.permute.xlu0 %380
        %382 = vset.pattern.permute.xlu0 6
        %383 = vperm.xlu0 %382, %v378
        %v384 = vpop.permute.xlu0 %383
        %vm385 = vcmp.eq.s32.totalorder %v282, %v381
        %vm386 = vcmp.eq.s32.totalorder %v282, %v384
        %v387 = vsel %vm385, 1, 0
        %v388 = vsel %vm386, 1, 0
        %v389 = vcvt.s32.f32 %v387
        %v390 = vcvt.s32.f32 %v388
        %v391 = vadd.f32 %v375, %v389
        %v392 = vadd.f32 %v376, %v390
        %v393 = vadd.s32 %v279, 21
        %v394 = vadd.s32 %v280, 21
        %395 = vset.pattern.permute.xlu0 7
        %396 = vperm.xlu0 %395, %v393
        %v397 = vpop.permute.xlu0 %396
        %398 = vset.pattern.permute.xlu0 7
        %399 = vperm.xlu0 %398, %v394
        %v400 = vpop.permute.xlu0 %399
        %vm401 = vcmp.eq.s32.totalorder %v282, %v397
        %vm402 = vcmp.eq.s32.totalorder %v282, %v400
        %v403 = vsel %vm401, 1, 0
        %v404 = vsel %vm402, 1, 0
        %v405 = vcvt.s32.f32 %v403
        %v406 = vcvt.s32.f32 %v404
        %v407 = vadd.f32 %v391, %v405
        %v408 = vadd.f32 %v392, %v406
        %v409 = vadd.s32 %v279, 24
        %v410 = vadd.s32 %v280, 24
        %411 = vset.pattern.permute.xlu0 8
        %412 = vperm.xlu0 %411, %v409
        %v413 = vpop.permute.xlu0 %412
        %414 = vset.pattern.permute.xlu0 8
        %415 = vperm.xlu0 %414, %v410
        %v416 = vpop.permute.xlu0 %415
        %vm417 = vcmp.eq.s32.totalorder %v282, %v413
        %vm418 = vcmp.eq.s32.totalorder %v282, %v416
        %v419 = vsel %vm417, 1, 0
        %v420 = vsel %vm418, 1, 0
        %v421 = vcvt.s32.f32 %v419
        %v422 = vcvt.s32.f32 %v420
        %v423 = vadd.f32 %v407, %v421
        %v424 = vadd.f32 %v408, %v422
        %v425 = vadd.s32 %v279, 27
        %v426 = vadd.s32 %v280, 27
        %427 = vset.pattern.permute.xlu0 9
        %428 = vperm.xlu0 %427, %v425
        %v429 = vpop.permute.xlu0 %428
        %430 = vset.pattern.permute.xlu0 9
        %431 = vperm.xlu0 %430, %v426
        %v432 = vpop.permute.xlu0 %431
        %vm433 = vcmp.eq.s32.totalorder %v282, %v429
        %vm434 = vcmp.eq.s32.totalorder %v282, %v432
        %v435 = vsel %vm433, 1, 0
        %v436 = vsel %vm434, 1, 0
        %v437 = vcvt.s32.f32 %v435
        %v438 = vcvt.s32.f32 %v436
        %v439 = vadd.f32 %v423, %v437
        %v440 = vadd.f32 %v424, %v438
        %v441 = vadd.s32 %v279, 30
        %v442 = vadd.s32 %v280, 30
        %443 = vset.pattern.permute.xlu0 10
        %444 = vperm.xlu0 %443, %v441
        %v445 = vpop.permute.xlu0 %444
        %446 = vset.pattern.permute.xlu0 10
        %447 = vperm.xlu0 %446, %v442
        %v448 = vpop.permute.xlu0 %447
        %vm449 = vcmp.eq.s32.totalorder %v282, %v445
        %vm450 = vcmp.eq.s32.totalorder %v282, %v448
        %v451 = vsel %vm449, 1, 0
        %v452 = vsel %vm450, 1, 0
        %v453 = vcvt.s32.f32 %v451
        %v454 = vcvt.s32.f32 %v452
        %v455 = vadd.f32 %v439, %v453
        %v456 = vadd.f32 %v440, %v454
        %v457 = vadd.s32 %v279, 33
        %v458 = vadd.s32 %v280, 33
        %459 = vset.pattern.permute.xlu0 11
        %460 = vperm.xlu0 %459, %v457
        %v461 = vpop.permute.xlu0 %460
        %462 = vset.pattern.permute.xlu0 11
        %463 = vperm.xlu0 %462, %v458
        %v464 = vpop.permute.xlu0 %463
        %vm465 = vcmp.eq.s32.totalorder %v282, %v461
        %vm466 = vcmp.eq.s32.totalorder %v282, %v464
        %v467 = vsel %vm465, 1, 0
        %v468 = vsel %vm466, 1, 0
        %v469 = vcvt.s32.f32 %v467
        %v470 = vcvt.s32.f32 %v468
        %v471 = vadd.f32 %v455, %v469
        %v472 = vadd.f32 %v456, %v470
        %v473 = vadd.s32 %v279, 36
        %v474 = vadd.s32 %v280, 36
        %475 = vset.pattern.permute.xlu0 12
        %476 = vperm.xlu0 %475, %v473
        %v477 = vpop.permute.xlu0 %476
        %478 = vset.pattern.permute.xlu0 12
        %479 = vperm.xlu0 %478, %v474
        %v480 = vpop.permute.xlu0 %479
        %vm481 = vcmp.eq.s32.totalorder %v282, %v477
        %vm482 = vcmp.eq.s32.totalorder %v282, %v480
        %v483 = vsel %vm481, 1, 0
        %v484 = vsel %vm482, 1, 0
        %v485 = vcvt.s32.f32 %v483
        %v486 = vcvt.s32.f32 %v484
        %v487 = vadd.f32 %v471, %v485
        %v488 = vadd.f32 %v472, %v486
        %v489 = vadd.s32 %v279, 39
        %v490 = vadd.s32 %v280, 39
        %491 = vset.pattern.permute.xlu0 13
        %492 = vperm.xlu0 %491, %v489
        %v493 = vpop.permute.xlu0 %492
        %494 = vset.pattern.permute.xlu0 13
        %495 = vperm.xlu0 %494, %v490
        %v496 = vpop.permute.xlu0 %495
        %vm497 = vcmp.eq.s32.totalorder %v282, %v493
        %vm498 = vcmp.eq.s32.totalorder %v282, %v496
        %v499 = vsel %vm497, 1, 0
        %v500 = vsel %vm498, 1, 0
        %v501 = vcvt.s32.f32 %v499
        %v502 = vcvt.s32.f32 %v500
        %v503 = vadd.f32 %v487, %v501
        %v504 = vadd.f32 %v488, %v502
        %v505 = vadd.s32 %v279, 42
        %v506 = vadd.s32 %v280, 42
        %507 = vset.pattern.permute.xlu0 14
        %508 = vperm.xlu0 %507, %v505
        %v509 = vpop.permute.xlu0 %508
        %510 = vset.pattern.permute.xlu0 14
        %511 = vperm.xlu0 %510, %v506
        %v512 = vpop.permute.xlu0 %511
        %vm513 = vcmp.eq.s32.totalorder %v282, %v509
        %vm514 = vcmp.eq.s32.totalorder %v282, %v512
        %v515 = vsel %vm513, 1, 0
        %v516 = vsel %vm514, 1, 0
        %v517 = vcvt.s32.f32 %v515
        %v518 = vcvt.s32.f32 %v516
        %v519 = vadd.f32 %v503, %v517
        %v520 = vadd.f32 %v504, %v518
        %v521 = vadd.s32 %v279, 45
        %v522 = vadd.s32 %v280, 45
        %523 = vset.pattern.permute.xlu0 15
        %524 = vperm.xlu0 %523, %v521
        %v525 = vpop.permute.xlu0 %524
        %526 = vset.pattern.permute.xlu0 15
        %527 = vperm.xlu0 %526, %v522
        %v528 = vpop.permute.xlu0 %527
        %vm529 = vcmp.eq.s32.totalorder %v282, %v525
        %vm530 = vcmp.eq.s32.totalorder %v282, %v528
        %v531 = vsel %vm529, 1, 0
        %v532 = vsel %vm530, 1, 0
        %v533 = vcvt.s32.f32 %v531
        %v534 = vcvt.s32.f32 %v532
        %v535 = vadd.f32 %v519, %v533
        %v536 = vadd.f32 %v520, %v534
        %v537 = vadd.s32 %v279, 48
        %v538 = vadd.s32 %v280, 48
        %539 = vset.pattern.permute.xlu0 16
        %540 = vperm.xlu0 %539, %v537
        %v541 = vpop.permute.xlu0 %540
        %542 = vset.pattern.permute.xlu0 16
        %543 = vperm.xlu0 %542, %v538
        %v544 = vpop.permute.xlu0 %543
        %vm545 = vcmp.eq.s32.totalorder %v282, %v541
        %vm546 = vcmp.eq.s32.totalorder %v282, %v544
        %v547 = vsel %vm545, 1, 0
        %v548 = vsel %vm546, 1, 0
        %v549 = vcvt.s32.f32 %v547
        %v550 = vcvt.s32.f32 %v548
        %v551 = vadd.f32 %v535, %v549
        %v552 = vadd.f32 %v536, %v550
        %v553 = vadd.s32 %v279, 51
        %v554 = vadd.s32 %v280, 51
        %555 = vset.pattern.permute.xlu0 17
        %556 = vperm.xlu0 %555, %v553
        %v557 = vpop.permute.xlu0 %556
        %558 = vset.pattern.permute.xlu0 17
        %559 = vperm.xlu0 %558, %v554
        %v560 = vpop.permute.xlu0 %559
        %vm561 = vcmp.eq.s32.totalorder %v282, %v557
        %vm562 = vcmp.eq.s32.totalorder %v282, %v560
        %v563 = vsel %vm561, 1, 0
        %v564 = vsel %vm562, 1, 0
        %v565 = vcvt.s32.f32 %v563
        %v566 = vcvt.s32.f32 %v564
        %v567 = vadd.f32 %v551, %v565
        %v568 = vadd.f32 %v552, %v566
        %v569 = vadd.s32 %v279, 54
        %v570 = vadd.s32 %v280, 54
        %571 = vset.pattern.permute.xlu0 18
        %572 = vperm.xlu0 %571, %v569
        %v573 = vpop.permute.xlu0 %572
        %574 = vset.pattern.permute.xlu0 18
        %575 = vperm.xlu0 %574, %v570
        %v576 = vpop.permute.xlu0 %575
        %vm577 = vcmp.eq.s32.totalorder %v282, %v573
        %vm578 = vcmp.eq.s32.totalorder %v282, %v576
        %v579 = vsel %vm577, 1, 0
        %v580 = vsel %vm578, 1, 0
        %v581 = vcvt.s32.f32 %v579
        %v582 = vcvt.s32.f32 %v580
        %v583 = vadd.f32 %v567, %v581
        %v584 = vadd.f32 %v568, %v582
        %v585 = vadd.s32 %v279, 57
        %v586 = vadd.s32 %v280, 57
        %587 = vset.pattern.permute.xlu0 19
        %588 = vperm.xlu0 %587, %v585
        %v589 = vpop.permute.xlu0 %588
        %590 = vset.pattern.permute.xlu0 19
        %591 = vperm.xlu0 %590, %v586
        %v592 = vpop.permute.xlu0 %591
        %vm593 = vcmp.eq.s32.totalorder %v282, %v589
        %vm594 = vcmp.eq.s32.totalorder %v282, %v592
        %v595 = vsel %vm593, 1, 0
        %v596 = vsel %vm594, 1, 0
        %v597 = vcvt.s32.f32 %v595
        %v598 = vcvt.s32.f32 %v596
        %v599 = vadd.f32 %v583, %v597
        %v600 = vadd.f32 %v584, %v598
        %v601 = vadd.s32 %v279, 60
        %v602 = vadd.s32 %v280, 60
        %603 = vset.pattern.permute.xlu0 20
        %604 = vperm.xlu0 %603, %v601
        %v605 = vpop.permute.xlu0 %604
        %606 = vset.pattern.permute.xlu0 20
        %607 = vperm.xlu0 %606, %v602
        %v608 = vpop.permute.xlu0 %607
        %vm609 = vcmp.eq.s32.totalorder %v282, %v605
        %vm610 = vcmp.eq.s32.totalorder %v282, %v608
        %v611 = vsel %vm609, 1, 0
        %v612 = vsel %vm610, 1, 0
        %v613 = vcvt.s32.f32 %v611
        %v614 = vcvt.s32.f32 %v612
        %v615 = vadd.f32 %v599, %v613
        %v616 = vadd.f32 %v600, %v614
        %v617 = vadd.s32 %v279, 63
        %v618 = vadd.s32 %v280, 63
        %619 = vset.pattern.permute.xlu0 21
        %620 = vperm.xlu0 %619, %v617
        %v621 = vpop.permute.xlu0 %620
        %622 = vset.pattern.permute.xlu0 21
        %623 = vperm.xlu0 %622, %v618
        %v624 = vpop.permute.xlu0 %623
        %vm625 = vcmp.eq.s32.totalorder %v282, %v621
        %vm626 = vcmp.eq.s32.totalorder %v282, %v624
        %v627 = vsel %vm625, 1, 0
        %v628 = vsel %vm626, 1, 0
        %v629 = vcvt.s32.f32 %v627
        %v630 = vcvt.s32.f32 %v628
        %v631 = vadd.f32 %v615, %v629
        %v632 = vadd.f32 %v616, %v630
        %v633 = vadd.s32 %v279, 66
        %v634 = vadd.s32 %v280, 66
        %635 = vset.pattern.permute.xlu0 22
        %636 = vperm.xlu0 %635, %v633
        %v637 = vpop.permute.xlu0 %636
        %638 = vset.pattern.permute.xlu0 22
        %639 = vperm.xlu0 %638, %v634
        %v640 = vpop.permute.xlu0 %639
        %vm641 = vcmp.eq.s32.totalorder %v282, %v637
        %vm642 = vcmp.eq.s32.totalorder %v282, %v640
        %v643 = vsel %vm641, 1, 0
        %v644 = vsel %vm642, 1, 0
        %v645 = vcvt.s32.f32 %v643
        %v646 = vcvt.s32.f32 %v644
        %v647 = vadd.f32 %v631, %v645
        %v648 = vadd.f32 %v632, %v646
        %v649 = vadd.s32 %v279, 69
        %v650 = vadd.s32 %v280, 69
        %651 = vset.pattern.permute.xlu0 23
        %652 = vperm.xlu0 %651, %v649
        %v653 = vpop.permute.xlu0 %652
        %654 = vset.pattern.permute.xlu0 23
        %655 = vperm.xlu0 %654, %v650
        %v656 = vpop.permute.xlu0 %655
        %vm657 = vcmp.eq.s32.totalorder %v282, %v653
        %vm658 = vcmp.eq.s32.totalorder %v282, %v656
        %v659 = vsel %vm657, 1, 0
        %v660 = vsel %vm658, 1, 0
        %v661 = vcvt.s32.f32 %v659
        %v662 = vcvt.s32.f32 %v660
        %v663 = vadd.f32 %v647, %v661
        %v664 = vadd.f32 %v648, %v662
        %v665 = vadd.s32 %v279, 72
        %v666 = vadd.s32 %v280, 72
        %667 = vset.pattern.permute.xlu0 24
        %668 = vperm.xlu0 %667, %v665
        %v669 = vpop.permute.xlu0 %668
        %670 = vset.pattern.permute.xlu0 24
        %671 = vperm.xlu0 %670, %v666
        %v672 = vpop.permute.xlu0 %671
        %vm673 = vcmp.eq.s32.totalorder %v282, %v669
        %vm674 = vcmp.eq.s32.totalorder %v282, %v672
        %v675 = vsel %vm673, 1, 0
        %v676 = vsel %vm674, 1, 0
        %v677 = vcvt.s32.f32 %v675
        %v678 = vcvt.s32.f32 %v676
        %v679 = vadd.f32 %v663, %v677
        %v680 = vadd.f32 %v664, %v678
        %v681 = vadd.s32 %v279, 75
        %v682 = vadd.s32 %v280, 75
        %683 = vset.pattern.permute.xlu0 25
        %684 = vperm.xlu0 %683, %v681
        %v685 = vpop.permute.xlu0 %684
        %686 = vset.pattern.permute.xlu0 25
        %687 = vperm.xlu0 %686, %v682
        %v688 = vpop.permute.xlu0 %687
        %vm689 = vcmp.eq.s32.totalorder %v282, %v685
        %vm690 = vcmp.eq.s32.totalorder %v282, %v688
        %v691 = vsel %vm689, 1, 0
        %v692 = vsel %vm690, 1, 0
        %v693 = vcvt.s32.f32 %v691
        %v694 = vcvt.s32.f32 %v692
        %v695 = vadd.f32 %v679, %v693
        %v696 = vadd.f32 %v680, %v694
        %v697 = vadd.s32 %v279, 78
        %v698 = vadd.s32 %v280, 78
        %699 = vset.pattern.permute.xlu0 26
        %700 = vperm.xlu0 %699, %v697
        %v701 = vpop.permute.xlu0 %700
        %702 = vset.pattern.permute.xlu0 26
        %703 = vperm.xlu0 %702, %v698
        %v704 = vpop.permute.xlu0 %703
        %vm705 = vcmp.eq.s32.totalorder %v282, %v701
        %vm706 = vcmp.eq.s32.totalorder %v282, %v704
        %v707 = vsel %vm705, 1, 0
        %v708 = vsel %vm706, 1, 0
        %v709 = vcvt.s32.f32 %v707
        %v710 = vcvt.s32.f32 %v708
        %v711 = vadd.f32 %v695, %v709
        %v712 = vadd.f32 %v696, %v710
        %v713 = vadd.s32 %v279, 81
        %v714 = vadd.s32 %v280, 81
        %715 = vset.pattern.permute.xlu0 27
        %716 = vperm.xlu0 %715, %v713
        %v717 = vpop.permute.xlu0 %716
        %718 = vset.pattern.permute.xlu0 27
        %719 = vperm.xlu0 %718, %v714
        %v720 = vpop.permute.xlu0 %719
        %vm721 = vcmp.eq.s32.totalorder %v282, %v717
        %vm722 = vcmp.eq.s32.totalorder %v282, %v720
        %v723 = vsel %vm721, 1, 0
        %v724 = vsel %vm722, 1, 0
        %v725 = vcvt.s32.f32 %v723
        %v726 = vcvt.s32.f32 %v724
        %v727 = vadd.f32 %v711, %v725
        %v728 = vadd.f32 %v712, %v726
        %v729 = vadd.s32 %v279, 84
        %v730 = vadd.s32 %v280, 84
        %731 = vset.pattern.permute.xlu0 28
        %732 = vperm.xlu0 %731, %v729
        %v733 = vpop.permute.xlu0 %732
        %734 = vset.pattern.permute.xlu0 28
        %735 = vperm.xlu0 %734, %v730
        %v736 = vpop.permute.xlu0 %735
        %vm737 = vcmp.eq.s32.totalorder %v282, %v733
        %vm738 = vcmp.eq.s32.totalorder %v282, %v736
        %v739 = vsel %vm737, 1, 0
        %v740 = vsel %vm738, 1, 0
        %v741 = vcvt.s32.f32 %v739
        %v742 = vcvt.s32.f32 %v740
        %v743 = vadd.f32 %v727, %v741
        %v744 = vadd.f32 %v728, %v742
        %v745 = vadd.s32 %v279, 87
        %v746 = vadd.s32 %v280, 87
        %747 = vset.pattern.permute.xlu0 29
        %748 = vperm.xlu0 %747, %v745
        %v749 = vpop.permute.xlu0 %748
        %750 = vset.pattern.permute.xlu0 29
        %751 = vperm.xlu0 %750, %v746
        %v752 = vpop.permute.xlu0 %751
        %vm753 = vcmp.eq.s32.totalorder %v282, %v749
        %vm754 = vcmp.eq.s32.totalorder %v282, %v752
        %v755 = vsel %vm753, 1, 0
        %v756 = vsel %vm754, 1, 0
        %v757 = vcvt.s32.f32 %v755
        %v758 = vcvt.s32.f32 %v756
        %v759 = vadd.f32 %v743, %v757
        %v760 = vadd.f32 %v744, %v758
        %v761 = vadd.s32 %v279, 90
        %v762 = vadd.s32 %v280, 90
        %763 = vset.pattern.permute.xlu0 30
        %764 = vperm.xlu0 %763, %v761
        %v765 = vpop.permute.xlu0 %764
        %766 = vset.pattern.permute.xlu0 30
        %767 = vperm.xlu0 %766, %v762
        %v768 = vpop.permute.xlu0 %767
        %vm769 = vcmp.eq.s32.totalorder %v282, %v765
        %vm770 = vcmp.eq.s32.totalorder %v282, %v768
        %v771 = vsel %vm769, 1, 0
        %v772 = vsel %vm770, 1, 0
        %v773 = vcvt.s32.f32 %v771
        %v774 = vcvt.s32.f32 %v772
        %v775 = vadd.f32 %v759, %v773
        %v776 = vadd.f32 %v760, %v774
        %v777 = vadd.s32 %v279, 93
        %v778 = vadd.s32 %v280, 93
        %779 = vset.pattern.permute.xlu0 31
        %780 = vperm.xlu0 %779, %v777
        %v781 = vpop.permute.xlu0 %780
        %782 = vset.pattern.permute.xlu0 31
        %783 = vperm.xlu0 %782, %v778
        %v784 = vpop.permute.xlu0 %783
        %vm785 = vcmp.eq.s32.totalorder %v282, %v781
        %vm786 = vcmp.eq.s32.totalorder %v282, %v784
        %v787 = vsel %vm785, 1, 0
        %v788 = vsel %vm786, 1, 0
        %v789 = vcvt.s32.f32 %v787
        %v790 = vcvt.s32.f32 %v788
        %v791 = vadd.f32 %v775, %v789
        %v792 = vadd.f32 %v776, %v790
        %v793 = vadd.s32 %v279, 96
        %v794 = vadd.s32 %v280, 96
        %795 = vset.pattern.permute.xlu0 32
        %796 = vperm.xlu0 %795, %v793
        %v797 = vpop.permute.xlu0 %796
        %798 = vset.pattern.permute.xlu0 32
        %799 = vperm.xlu0 %798, %v794
        %v800 = vpop.permute.xlu0 %799
        %vm801 = vcmp.eq.s32.totalorder %v282, %v797
        %vm802 = vcmp.eq.s32.totalorder %v282, %v800
        %v803 = vsel %vm801, 1, 0
        %v804 = vsel %vm802, 1, 0
        %v805 = vcvt.s32.f32 %v803
        %v806 = vcvt.s32.f32 %v804
        %v807 = vadd.f32 %v791, %v805
        %v808 = vadd.f32 %v792, %v806
        %v809 = vadd.s32 %v279, 99
        %v810 = vadd.s32 %v280, 99
        %811 = vset.pattern.permute.xlu0 33
        %812 = vperm.xlu0 %811, %v809
        %v813 = vpop.permute.xlu0 %812
        %814 = vset.pattern.permute.xlu0 33
        %815 = vperm.xlu0 %814, %v810
        %v816 = vpop.permute.xlu0 %815
        %vm817 = vcmp.eq.s32.totalorder %v282, %v813
        %vm818 = vcmp.eq.s32.totalorder %v282, %v816
        %v819 = vsel %vm817, 1, 0
        %v820 = vsel %vm818, 1, 0
        %v821 = vcvt.s32.f32 %v819
        %v822 = vcvt.s32.f32 %v820
        %v823 = vadd.f32 %v807, %v821
        %v824 = vadd.f32 %v808, %v822
        %v825 = vadd.s32 %v279, 102
        %v826 = vadd.s32 %v280, 102
        %827 = vset.pattern.permute.xlu0 34
        %828 = vperm.xlu0 %827, %v825
        %v829 = vpop.permute.xlu0 %828
        %830 = vset.pattern.permute.xlu0 34
        %831 = vperm.xlu0 %830, %v826
        %v832 = vpop.permute.xlu0 %831
        %vm833 = vcmp.eq.s32.totalorder %v282, %v829
        %vm834 = vcmp.eq.s32.totalorder %v282, %v832
        %v835 = vsel %vm833, 1, 0
        %v836 = vsel %vm834, 1, 0
        %v837 = vcvt.s32.f32 %v835
        %v838 = vcvt.s32.f32 %v836
        %v839 = vadd.f32 %v823, %v837
        %v840 = vadd.f32 %v824, %v838
        %v841 = vadd.s32 %v279, 105
        %v842 = vadd.s32 %v280, 105
        %843 = vset.pattern.permute.xlu0 35
        %844 = vperm.xlu0 %843, %v841
        %v845 = vpop.permute.xlu0 %844
        %846 = vset.pattern.permute.xlu0 35
        %847 = vperm.xlu0 %846, %v842
        %v848 = vpop.permute.xlu0 %847
        %vm849 = vcmp.eq.s32.totalorder %v282, %v845
        %vm850 = vcmp.eq.s32.totalorder %v282, %v848
        %v851 = vsel %vm849, 1, 0
        %v852 = vsel %vm850, 1, 0
        %v853 = vcvt.s32.f32 %v851
        %v854 = vcvt.s32.f32 %v852
        %v855 = vadd.f32 %v839, %v853
        %v856 = vadd.f32 %v840, %v854
        %v857 = vadd.s32 %v279, 108
        %v858 = vadd.s32 %v280, 108
        %859 = vset.pattern.permute.xlu0 36
        %860 = vperm.xlu0 %859, %v857
        %v861 = vpop.permute.xlu0 %860
        %862 = vset.pattern.permute.xlu0 36
        %863 = vperm.xlu0 %862, %v858
        %v864 = vpop.permute.xlu0 %863
        %vm865 = vcmp.eq.s32.totalorder %v282, %v861
        %vm866 = vcmp.eq.s32.totalorder %v282, %v864
        %v867 = vsel %vm865, 1, 0
        %v868 = vsel %vm866, 1, 0
        %v869 = vcvt.s32.f32 %v867
        %v870 = vcvt.s32.f32 %v868
        %v871 = vadd.f32 %v855, %v869
        %v872 = vadd.f32 %v856, %v870
        %v873 = vadd.s32 %v279, 111
        %v874 = vadd.s32 %v280, 111
        %875 = vset.pattern.permute.xlu0 37
        %876 = vperm.xlu0 %875, %v873
        %v877 = vpop.permute.xlu0 %876
        %878 = vset.pattern.permute.xlu0 37
        %879 = vperm.xlu0 %878, %v874
        %v880 = vpop.permute.xlu0 %879
        %vm881 = vcmp.eq.s32.totalorder %v282, %v877
        %vm882 = vcmp.eq.s32.totalorder %v282, %v880
        %v883 = vsel %vm881, 1, 0
        %v884 = vsel %vm882, 1, 0
        %v885 = vcvt.s32.f32 %v883
        %v886 = vcvt.s32.f32 %v884
        %v887 = vadd.f32 %v871, %v885
        %v888 = vadd.f32 %v872, %v886
        %v889 = vadd.s32 %v279, 114
        %v890 = vadd.s32 %v280, 114
        %891 = vset.pattern.permute.xlu0 38
        %892 = vperm.xlu0 %891, %v889
        %v893 = vpop.permute.xlu0 %892
        %894 = vset.pattern.permute.xlu0 38
        %895 = vperm.xlu0 %894, %v890
        %v896 = vpop.permute.xlu0 %895
        %vm897 = vcmp.eq.s32.totalorder %v282, %v893
        %vm898 = vcmp.eq.s32.totalorder %v282, %v896
        %v899 = vsel %vm897, 1, 0
        %v900 = vsel %vm898, 1, 0
        %v901 = vcvt.s32.f32 %v899
        %v902 = vcvt.s32.f32 %v900
        %v903 = vadd.f32 %v887, %v901
        %v904 = vadd.f32 %v888, %v902
        %v905 = vadd.s32 %v279, 117
        %v906 = vadd.s32 %v280, 117
        %907 = vset.pattern.permute.xlu0 39
        %908 = vperm.xlu0 %907, %v905
        %v909 = vpop.permute.xlu0 %908
        %910 = vset.pattern.permute.xlu0 39
        %911 = vperm.xlu0 %910, %v906
        %v912 = vpop.permute.xlu0 %911
        %vm913 = vcmp.eq.s32.totalorder %v282, %v909
        %vm914 = vcmp.eq.s32.totalorder %v282, %v912
        %v915 = vsel %vm913, 1, 0
        %v916 = vsel %vm914, 1, 0
        %v917 = vcvt.s32.f32 %v915
        %v918 = vcvt.s32.f32 %v916
        %v919 = vadd.f32 %v903, %v917
        %v920 = vadd.f32 %v904, %v918
        %v921 = vpack.c.bf16 %v920, %v919
        %v922 = vld [vmem:[#allocation7] sm:$0xff]
        %v923 = vld [vmem:[#allocation7 + $0x8] sm:$0xff]
        %v924 = vld [vmem:[#allocation7 + $0x10] sm:$0xff]
        %v925 = vld [vmem:[#allocation7 + $0x18] sm:$0xff]
        %v926 = vld [vmem:[#allocation7 + $0x20] sm:$0xff]
        %v927 = vld [vmem:[#allocation7 + $0x28] sm:$0xff]
        %v928 = vld [vmem:[#allocation7 + $0x30] sm:$0xff]
        %v929 = vld [vmem:[#allocation7 + $0x38] sm:$0xff]
        %v930 = vld [vmem:[#allocation7 + $0x40] sm:$0xff]
        %v931 = vld [vmem:[#allocation7 + $0x48] sm:$0xff]
        %v932 = vld [vmem:[#allocation7 + $0x50] sm:$0xff]
        %v933 = vld [vmem:[#allocation7 + $0x58] sm:$0xff]
        %v934 = vld [vmem:[#allocation7 + $0x60] sm:$0xff]
        %v935 = vld [vmem:[#allocation7 + $0x68] sm:$0xff]
        %v936 = vld [vmem:[#allocation7 + $0x70] sm:$0xff]
        %v937 = vld [vmem:[#allocation7 + $0x78] sm:$0xff]
        %v938 = vld [vmem:[#allocation7 + $0x80] sm:$0xff]
        %v939 = vld [vmem:[#allocation7 + $0x88] sm:$0xff]
        %v940 = vld [vmem:[#allocation7 + $0x90] sm:$0xff]
        %v941 = vld [vmem:[#allocation7 + $0x98] sm:$0xff]
        %v942 = vld [vmem:[#allocation7 + $0xa0] sm:$0xff]
        %v943 = vld [vmem:[#allocation7 + $0xa8] sm:$0xff]
        %v944 = vld [vmem:[#allocation7 + $0xb0] sm:$0xff]
        %v945 = vld [vmem:[#allocation7 + $0xb8] sm:$0xff]
        %v946 = vld [vmem:[#allocation7 + $0xc0] sm:$0xff]
        %v947 = vld [vmem:[#allocation7 + $0xc8] sm:$0xff]
        %v948 = vld [vmem:[#allocation7 + $0xd0] sm:$0xff]
        %v949 = vld [vmem:[#allocation7 + $0xd8] sm:$0xff]
        %v950 = vld [vmem:[#allocation7 + $0xe0] sm:$0xff]
        %v951 = vld [vmem:[#allocation7 + $0xe8] sm:$0xff]
        %v952 = vld [vmem:[#allocation7 + $0xf0] sm:$0xff]
        %v953 = vld [vmem:[#allocation7 + $0xf8] sm:$0xff]
        %v954 = vld [vmem:[%s3] sm:$0xf]
        %v956 = vlaneseq
        %v957 = vshrl.u32 %v956, 7
        %v958 = vsub.s32 0, %v957
        %v959 = vrot.slane %v954, %v958
        %v960 = vlaneseq
        %v961 = vshrl.u32 %v960, 7
        %v962 = vsub.s32 1, %v961
        %v963 = vrot.slane %v954, %v962
        %v964 = vlaneseq
        %v965 = vshrl.u32 %v964, 7
        %v966 = vsub.s32 2, %v965
        %v967 = vrot.slane %v954, %v966
        %v968 = vlaneseq
        %v969 = vshrl.u32 %v968, 7
        %v970 = vsub.s32 3, %v969
        %v971 = vrot.slane %v954, %v970
        %v1008 = vunpack.c.l.b16 %v922
        %v1009 = vunpack.c.h.b16 %v922
        %v1010 = vunpack.c.l.b16 %v923
        %v1011 = vunpack.c.h.b16 %v923
        %v1012 = vunpack.c.l.b16 %v924
        %v1013 = vunpack.c.h.b16 %v924
        %v1014 = vunpack.c.l.b16 %v925
        %v1015 = vunpack.c.h.b16 %v925
        %v1016 = vunpack.c.l.b16 %v926
        %v1017 = vunpack.c.h.b16 %v926
        %v1018 = vunpack.c.l.b16 %v927
        %v1019 = vunpack.c.h.b16 %v927
        %v1020 = vunpack.c.l.b16 %v928
        %v1021 = vunpack.c.h.b16 %v928
        %v1022 = vunpack.c.l.b16 %v929
        %v1023 = vunpack.c.h.b16 %v929
        %v1024 = vunpack.c.l.b16 %v930
        %v1025 = vunpack.c.h.b16 %v930
        %v1026 = vunpack.c.l.b16 %v931
        %v1027 = vunpack.c.h.b16 %v931
        %v1028 = vunpack.c.l.b16 %v932
        %v1029 = vunpack.c.h.b16 %v932
        %v1030 = vunpack.c.l.b16 %v933
        %v1031 = vunpack.c.h.b16 %v933
        %v1032 = vunpack.c.l.b16 %v934
        %v1033 = vunpack.c.h.b16 %v934
        %v1034 = vunpack.c.l.b16 %v935
        %v1035 = vunpack.c.h.b16 %v935
        %v1036 = vunpack.c.l.b16 %v936
        %v1037 = vunpack.c.h.b16 %v936
        %v1038 = vunpack.c.l.b16 %v937
        %v1039 = vunpack.c.h.b16 %v937
        %v1040 = vunpack.c.l.b16 %v938
        %v1041 = vunpack.c.h.b16 %v938
        %v1042 = vunpack.c.l.b16 %v939
        %v1043 = vunpack.c.h.b16 %v939
        %v1044 = vunpack.c.l.b16 %v940
        %v1045 = vunpack.c.h.b16 %v940
        %v1046 = vunpack.c.l.b16 %v941
        %v1047 = vunpack.c.h.b16 %v941
        %v1048 = vunpack.c.l.b16 %v942
        %v1049 = vunpack.c.h.b16 %v942
        %v1050 = vunpack.c.l.b16 %v943
        %v1051 = vunpack.c.h.b16 %v943
        %v1052 = vunpack.c.l.b16 %v944
        %v1053 = vunpack.c.h.b16 %v944
        %v1054 = vunpack.c.l.b16 %v945
        %v1055 = vunpack.c.h.b16 %v945
        %v1056 = vunpack.c.l.b16 %v946
        %v1057 = vunpack.c.h.b16 %v946
        %v1058 = vunpack.c.l.b16 %v947
        %v1059 = vunpack.c.h.b16 %v947
        %v1060 = vunpack.c.l.b16 %v948
        %v1061 = vunpack.c.h.b16 %v948
        %v1062 = vunpack.c.l.b16 %v949
        %v1063 = vunpack.c.h.b16 %v949
        %v1064 = vunpack.c.l.b16 %v950
        %v1065 = vunpack.c.h.b16 %v950
        %v1066 = vunpack.c.l.b16 %v951
        %v1067 = vunpack.c.h.b16 %v951
        %v1068 = vunpack.c.l.b16 %v952
        %v1069 = vunpack.c.h.b16 %v952
        %v1070 = vunpack.c.l.b16 %v953
        %v1071 = vunpack.c.h.b16 %v953
        %v1072 = vpack.c.b16 %v1012, %v1008
        %v1073 = vpack.c.b16 %v1013, %v1009
        %v1074 = vpack.c.b16 %v1014, %v1010
        %v1075 = vpack.c.b16 %v1015, %v1011
        %v1076 = vpack.c.b16 %v1020, %v1016
        %v1077 = vpack.c.b16 %v1021, %v1017
        %v1078 = vpack.c.b16 %v1022, %v1018
        %v1079 = vpack.c.b16 %v1023, %v1019
        %v1080 = vpack.c.b16 %v1028, %v1024
        %v1081 = vpack.c.b16 %v1029, %v1025
        %v1082 = vpack.c.b16 %v1030, %v1026
        %v1083 = vpack.c.b16 %v1031, %v1027
        %v1084 = vpack.c.b16 %v1036, %v1032
        %v1085 = vpack.c.b16 %v1037, %v1033
        %v1086 = vpack.c.b16 %v1038, %v1034
        %v1087 = vpack.c.b16 %v1039, %v1035
        %v1088 = vpack.c.b16 %v1044, %v1040
        %v1089 = vpack.c.b16 %v1045, %v1041
        %v1090 = vpack.c.b16 %v1046, %v1042
        %v1091 = vpack.c.b16 %v1047, %v1043
        %v1092 = vpack.c.b16 %v1052, %v1048
        %v1093 = vpack.c.b16 %v1053, %v1049
        %v1094 = vpack.c.b16 %v1054, %v1050
        %v1095 = vpack.c.b16 %v1055, %v1051
        %v1096 = vpack.c.b16 %v1060, %v1056
        %v1097 = vpack.c.b16 %v1061, %v1057
        %v1098 = vpack.c.b16 %v1062, %v1058
        %v1099 = vpack.c.b16 %v1063, %v1059
        %v1100 = vpack.c.b16 %v1068, %v1064
        %v1101 = vpack.c.b16 %v1069, %v1065
        %v1102 = vpack.c.b16 %v1070, %v1066
        %v1103 = vpack.c.b16 %v1071, %v1067
        %1136 = vmatprep.subr.bf16.mxu0 %v1073
        %1137 = vmatpush1.bf16.msra.mxu0 %v1072
        %1138 = vmatprep.subr.bf16.mxu0 %v1077
        %1139 = vmatpush1.bf16.msra.mxu0 %v1076
        %1140 = vmatprep.subr.bf16.mxu0 %v1081
        %1141 = vmatpush1.bf16.msra.mxu0 %v1080
        %1142 = vmatprep.subr.bf16.mxu0 %v1085
        %1143 = vmatpush1.bf16.msra.mxu0 %v1084
        %1144 = vmatprep.subr.bf16.mxu0 %v1089
        %1145 = vmatpush1.bf16.msra.mxu0 %v1088
        %1146 = vmatprep.subr.bf16.mxu0 %v1093
        %1147 = vmatpush1.bf16.msra.mxu0 %v1092
        %1148 = vmatprep.subr.bf16.mxu0 %v1097
        %1149 = vmatpush1.bf16.msra.mxu0 %v1096
        %1150 = vmatprep.subr.bf16.mxu0 %v1101
        %1151 = vmatpush1.bf16.msra.mxu0 %v1100
        %1152 = vmatprep.subr.bf16.mxu0 0
        %1153 = vmatpush1.bf16.msra.mxu0 0
        %1154 = vmatprep.subr.bf16.mxu0 0
        %1155 = vmatpush1.bf16.msra.mxu0 0
        %1156 = vmatprep.subr.bf16.mxu0 0
        %1157 = vmatpush1.bf16.msra.mxu0 0
        %1158 = vmatprep.subr.bf16.mxu0 0
        %1159 = vmatpush1.bf16.msra.mxu0 0
        %1160 = vmatprep.subr.bf16.mxu0 0
        %1161 = vmatpush1.bf16.msra.mxu0 0
        %1162 = vmatprep.subr.bf16.mxu0 0
        %1163 = vmatpush1.bf16.msra.mxu0 0
        %1164 = vmatprep.subr.bf16.mxu0 0
        %1165 = vmatpush1.bf16.msra.mxu0 0
        %1166 = vmatprep.subr.bf16.mxu0 0
        %1167 = vmatpush1.bf16.msra.mxu0 0
        %1168 = vmatprep.mubr.bf16.mxu0 0
        %1169 = vmatmul.mubr.bf16.gmra.mrb[0].mxu0 %v921
        %v1170 = vpop.f32.mrb[0].mxu0
        %v1171 = vadd.f32 %v959, %v1170
        %v1172 = vpop.f32.mrb[0].mxu0
        %v1173 = vadd.f32 %v963, %v1172
        %v1174 = vpop.f32.mrb[0].mxu0
        %v1175 = vadd.f32 %v959, %v1174
        %v1176 = vpop.f32.mrb[0].mxu0
        %v1177 = vadd.f32 %v963, %v1176
        %1178 = vdwg.mxu0
        %1179 = vmatprep.subr.bf16.mxu0 %v1075
        %1180 = vmatpush1.bf16.msra.mxu0 %v1074
        %1181 = vmatprep.subr.bf16.mxu0 %v1079
        %1182 = vmatpush1.bf16.msra.mxu0 %v1078
        %1183 = vmatprep.subr.bf16.mxu0 %v1083
        %1184 = vmatpush1.bf16.msra.mxu0 %v1082
        %1185 = vmatprep.subr.bf16.mxu0 %v1087
        %1186 = vmatpush1.bf16.msra.mxu0 %v1086
        %1187 = vmatprep.subr.bf16.mxu0 %v1091
        %1188 = vmatpush1.bf16.msra.mxu0 %v1090
        %1189 = vmatprep.subr.bf16.mxu0 %v1095
        %1190 = vmatpush1.bf16.msra.mxu0 %v1094
        %1191 = vmatprep.subr.bf16.mxu0 %v1099
        %1192 = vmatpush1.bf16.msra.mxu0 %v1098
        %1193 = vmatprep.subr.bf16.mxu0 %v1103
        %1194 = vmatpush1.bf16.msra.mxu0 %v1102
        %1195 = vmatprep.subr.bf16.mxu0 0
        %1196 = vmatpush1.bf16.msra.mxu0 0
        %1197 = vmatprep.subr.bf16.mxu0 0
        %1198 = vmatpush1.bf16.msra.mxu0 0
        %1199 = vmatprep.subr.bf16.mxu0 0
        %1200 = vmatpush1.bf16.msra.mxu0 0
        %1201 = vmatprep.subr.bf16.mxu0 0
        %1202 = vmatpush1.bf16.msra.mxu0 0
        %1203 = vmatprep.subr.bf16.mxu0 0
        %1204 = vmatpush1.bf16.msra.mxu0 0
        %1205 = vmatprep.subr.bf16.mxu0 0
        %1206 = vmatpush1.bf16.msra.mxu0 0
        %1207 = vmatprep.subr.bf16.mxu0 0
        %1208 = vmatpush1.bf16.msra.mxu0 0
        %1209 = vmatprep.subr.bf16.mxu0 0
        %1210 = vmatpush1.bf16.msra.mxu0 0
        %1211 = vmatprep.mubr.bf16.mxu0 0
        %1212 = vmatmul.mubr.bf16.gmra.mrb[0].mxu0 %v921
        %v1213 = vpop.f32.mrb[0].mxu0
        %v1214 = vadd.f32 %v967, %v1213
        %v1215 = vpop.f32.mrb[0].mxu0
        %v1216 = vadd.f32 %v971, %v1215
        %v1217 = vpop.f32.mrb[0].mxu0
        %v1218 = vadd.f32 %v967, %v1217
        %v1219 = vpop.f32.mrb[0].mxu0
        %v1220 = vadd.f32 %v971, %v1219
        %1221 = vdwg.mxu0
        %v1222 = vxor.u32 %v1171, 2147483648
        %v1223 = vxor.u32 %v1173, 2147483648
        %v1224 = vxor.u32 %v1214, 2147483648
        %v1225 = vxor.u32 %v1216, 2147483648
        %v1226 = vxor.u32 %v1175, 2147483648
        %v1227 = vxor.u32 %v1177, 2147483648
        %v1228 = vxor.u32 %v1218, 2147483648
        %v1229 = vxor.u32 %v1220, 2147483648
        %v1230 = vmul.f32 %v1222, 1.442695
        %v1231 = vpow.pop %v1230
        %v1232 = vmul.f32 %v1223, 1.442695
        %v1233 = vpow.pop %v1232
        %v1234 = vmul.f32 %v1224, 1.442695
        %v1235 = vpow.pop %v1234
        %v1236 = vmul.f32 %v1225, 1.442695
        %v1237 = vpow.pop %v1236
        %v1238 = vmul.f32 %v1226, 1.442695
        %v1239 = vpow.pop %v1238
        %v1240 = vmul.f32 %v1227, 1.442695
        %v1241 = vpow.pop %v1240
        %v1242 = vmul.f32 %v1228, 1.442695
        %v1243 = vpow.pop %v1242
        %v1244 = vmul.f32 %v1229, 1.442695
        %v1245 = vpow.pop %v1244
        %v1246 = vadd.f32 %v1231, 1.0
        %v1247 = vadd.f32 %v1233, 1.0
        %v1248 = vadd.f32 %v1235, 1.0
        %v1249 = vadd.f32 %v1237, 1.0
        %v1250 = vadd.f32 %v1239, 1.0
        %v1251 = vadd.f32 %v1241, 1.0
        %v1252 = vadd.f32 %v1243, 1.0
        %v1253 = vadd.f32 %v1245, 1.0
        %v1254 = vrcp.pop %v1246
        %v1255 = vmul.f32 1.0, %v1254
        %v1256 = vrcp.pop %v1247
        %v1257 = vmul.f32 1.0, %v1256
        %v1258 = vrcp.pop %v1248
        %v1259 = vmul.f32 1.0, %v1258
        %v1260 = vrcp.pop %v1249
        %v1261 = vmul.f32 1.0, %v1260
        %v1262 = vrcp.pop %v1250
        %v1263 = vmul.f32 1.0, %v1262
        %v1264 = vrcp.pop %v1251
        %v1265 = vmul.f32 1.0, %v1264
        %v1266 = vrcp.pop %v1252
        %v1267 = vmul.f32 1.0, %v1266
        %v1268 = vrcp.pop %v1253
        %v1269 = vmul.f32 1.0, %v1268
        %v1270 = vmul.f32 %v1171, %v1255
        %v1271 = vmul.f32 %v1173, %v1257
        %v1272 = vmul.f32 %v1214, %v1259
        %v1273 = vmul.f32 %v1216, %v1261
        %v1274 = vmul.f32 %v1175, %v1263
        %v1275 = vmul.f32 %v1177, %v1265
        %v1276 = vmul.f32 %v1218, %v1267
        %v1277 = vmul.f32 %v1220, %v1269
        %v1278 = vpack.c.bf16 %v1274, %v1270
        %v1279 = vpack.c.bf16 %v1275, %v1271
        %v1280 = vpack.c.bf16 %v1276, %v1272
        %v1281 = vpack.c.bf16 %v1277, %v1273
        %v1282 = vld [vmem:[#allocation9] sm:$0xff]
        %v1283 = vld [vmem:[#allocation9 + $0x8] sm:$0xff]
        %v1284 = vld [vmem:[#allocation9 + $0x10] sm:$0xff]
        %v1285 = vld [vmem:[#allocation9 + $0x18] sm:$0xff]
        %v1286 = vld [vmem:[#allocation9 + $0x20] sm:$0xff]
        %v1287 = vld [vmem:[#allocation9 + $0x28] sm:$0xff]
        %v1288 = vld [vmem:[#allocation9 + $0x30] sm:$0xff]
        %v1289 = vld [vmem:[#allocation9 + $0x38] sm:$0xff]
        %v1290 = vld [vmem:[#allocation9 + $0x40] sm:$0xff]
        %v1291 = vld [vmem:[#allocation9 + $0x48] sm:$0xff]
        %v1292 = vld [vmem:[#allocation9 + $0x50] sm:$0xff]
        %v1293 = vld [vmem:[#allocation9 + $0x58] sm:$0xff]
        %v1294 = vld [vmem:[#allocation9 + $0x60] sm:$0xff]
        %v1295 = vld [vmem:[#allocation9 + $0x68] sm:$0xff]
        %v1296 = vld [vmem:[#allocation9 + $0x70] sm:$0xff]
        %v1297 = vld [vmem:[#allocation9 + $0x78] sm:$0xff]
        %v1298 = vld [vmem:[#allocation9 + $0x80] sm:$0xff]
        %v1299 = vld [vmem:[#allocation9 + $0x88] sm:$0xff]
        %v1300 = vld [vmem:[#allocation9 + $0x90] sm:$0xff]
        %v1301 = vld [vmem:[#allocation9 + $0x98] sm:$0xff]
        %v1302 = vld [vmem:[#allocation9 + $0xa0] sm:$0xff]
        %v1303 = vld [vmem:[#allocation9 + $0xa8] sm:$0xff]
        %v1304 = vld [vmem:[#allocation9 + $0xb0] sm:$0xff]
        %v1305 = vld [vmem:[#allocation9 + $0xb8] sm:$0xff]
        %v1306 = vld [vmem:[#allocation9 + $0xc0] sm:$0xff]
        %v1307 = vld [vmem:[#allocation9 + $0xc8] sm:$0xff]
        %v1308 = vld [vmem:[#allocation9 + $0xd0] sm:$0xff]
        %v1309 = vld [vmem:[#allocation9 + $0xd8] sm:$0xff]
        %v1310 = vld [vmem:[#allocation9 + $0xe0] sm:$0xff]
        %v1311 = vld [vmem:[#allocation9 + $0xe8] sm:$0xff]
        %v1312 = vld [vmem:[#allocation9 + $0xf0] sm:$0xff]
        %v1313 = vld [vmem:[#allocation9 + $0xf8] sm:$0xff]
        %v1314 = vld [vmem:[#allocation9 + $0x100] sm:$0xff]
        %v1315 = vld [vmem:[#allocation9 + $0x108] sm:$0xff]
        %v1316 = vld [vmem:[#allocation9 + $0x110] sm:$0xff]
        %v1317 = vld [vmem:[#allocation9 + $0x118] sm:$0xff]
        %v1318 = vld [vmem:[#allocation9 + $0x120] sm:$0xff]
        %v1319 = vld [vmem:[#allocation9 + $0x128] sm:$0xff]
        %v1320 = vld [vmem:[#allocation9 + $0x130] sm:$0xff]
        %v1321 = vld [vmem:[#allocation9 + $0x138] sm:$0xff]
        %v1322 = vld [vmem:[#allocation9 + $0x140] sm:$0xff]
        %v1323 = vld [vmem:[#allocation9 + $0x148] sm:$0xff]
        %v1324 = vld [vmem:[#allocation9 + $0x150] sm:$0xff]
        %v1325 = vld [vmem:[#allocation9 + $0x158] sm:$0xff]
        %v1326 = vld [vmem:[#allocation9 + $0x160] sm:$0xff]
        %v1327 = vld [vmem:[#allocation9 + $0x168] sm:$0xff]
        %v1328 = vld [vmem:[#allocation9 + $0x170] sm:$0xff]
        %v1329 = vld [vmem:[#allocation9 + $0x178] sm:$0xff]
        %v1330 = vld [vmem:[#allocation9 + $0x180] sm:$0xff]
        %v1331 = vld [vmem:[#allocation9 + $0x188] sm:$0xff]
        %v1332 = vld [vmem:[#allocation9 + $0x190] sm:$0xff]
        %v1333 = vld [vmem:[#allocation9 + $0x198] sm:$0xff]
        %v1334 = vld [vmem:[#allocation9 + $0x1a0] sm:$0xff]
        %v1335 = vld [vmem:[#allocation9 + $0x1a8] sm:$0xff]
        %v1336 = vld [vmem:[#allocation9 + $0x1b0] sm:$0xff]
        %v1337 = vld [vmem:[#allocation9 + $0x1b8] sm:$0xff]
        %v1338 = vld [vmem:[#allocation9 + $0x1c0] sm:$0xff]
        %v1339 = vld [vmem:[#allocation9 + $0x1c8] sm:$0xff]
        %v1340 = vld [vmem:[#allocation9 + $0x1d0] sm:$0xff]
        %v1341 = vld [vmem:[#allocation9 + $0x1d8] sm:$0xff]
        %v1342 = vld [vmem:[#allocation9 + $0x1e0] sm:$0xff]
        %v1343 = vld [vmem:[#allocation9 + $0x1e8] sm:$0xff]
        %v1344 = vld [vmem:[#allocation9 + $0x1f0] sm:$0xff]
        %v1345 = vld [vmem:[#allocation9 + $0x1f8] sm:$0xff]
        %v1346 = vld [vmem:[#allocation9 + $0x200] sm:$0xff]
        %v1347 = vld [vmem:[#allocation9 + $0x208] sm:$0xff]
        %v1348 = vld [vmem:[#allocation9 + $0x210] sm:$0xff]
        %v1349 = vld [vmem:[#allocation9 + $0x218] sm:$0xff]
        %v1350 = vld [vmem:[#allocation9 + $0x220] sm:$0xff]
        %v1351 = vld [vmem:[#allocation9 + $0x228] sm:$0xff]
        %v1352 = vld [vmem:[#allocation9 + $0x230] sm:$0xff]
        %v1353 = vld [vmem:[#allocation9 + $0x238] sm:$0xff]
        %v1354 = vld [vmem:[#allocation9 + $0x240] sm:$0xff]
        %v1355 = vld [vmem:[#allocation9 + $0x248] sm:$0xff]
        %v1356 = vld [vmem:[#allocation9 + $0x250] sm:$0xff]
        %v1357 = vld [vmem:[#allocation9 + $0x258] sm:$0xff]
        %v1358 = vld [vmem:[#allocation9 + $0x260] sm:$0xff]
        %v1359 = vld [vmem:[#allocation9 + $0x268] sm:$0xff]
        %v1360 = vld [vmem:[#allocation9 + $0x270] sm:$0xff]
        %v1361 = vld [vmem:[#allocation9 + $0x278] sm:$0xff]
        %v1362 = vld [vmem:[#allocation9 + $0x280] sm:$0xff]
        %v1363 = vld [vmem:[#allocation9 + $0x288] sm:$0xff]
        %v1364 = vld [vmem:[#allocation9 + $0x290] sm:$0xff]
        %v1365 = vld [vmem:[#allocation9 + $0x298] sm:$0xff]
        %v1366 = vld [vmem:[#allocation9 + $0x2a0] sm:$0xff]
        %v1367 = vld [vmem:[#allocation9 + $0x2a8] sm:$0xff]
        %v1368 = vld [vmem:[#allocation9 + $0x2b0] sm:$0xff]
        %v1369 = vld [vmem:[#allocation9 + $0x2b8] sm:$0xff]
        %v1370 = vld [vmem:[#allocation9 + $0x2c0] sm:$0xff]
        %v1371 = vld [vmem:[#allocation9 + $0x2c8] sm:$0xff]
        %v1372 = vld [vmem:[#allocation9 + $0x2d0] sm:$0xff]
        %v1373 = vld [vmem:[#allocation9 + $0x2d8] sm:$0xff]
        %v1374 = vld [vmem:[#allocation9 + $0x2e0] sm:$0xff]
        %v1375 = vld [vmem:[#allocation9 + $0x2e8] sm:$0xff]
        %v1376 = vld [vmem:[#allocation9 + $0x2f0] sm:$0xff]
        %v1377 = vld [vmem:[#allocation9 + $0x2f8] sm:$0xff]
        %v1378 = vld [vmem:[#allocation9 + $0x300] sm:$0xff]
        %v1379 = vld [vmem:[#allocation9 + $0x308] sm:$0xff]
        %v1380 = vld [vmem:[#allocation9 + $0x310] sm:$0xff]
        %v1381 = vld [vmem:[#allocation9 + $0x318] sm:$0xff]
        %v1382 = vld [vmem:[#allocation9 + $0x320] sm:$0xff]
        %v1383 = vld [vmem:[#allocation9 + $0x328] sm:$0xff]
        %v1384 = vld [vmem:[#allocation9 + $0x330] sm:$0xff]
        %v1385 = vld [vmem:[#allocation9 + $0x338] sm:$0xff]
        %v1386 = vld [vmem:[#allocation9 + $0x340] sm:$0xff]
        %v1387 = vld [vmem:[#allocation9 + $0x348] sm:$0xff]
        %v1388 = vld [vmem:[#allocation9 + $0x350] sm:$0xff]
        %v1389 = vld [vmem:[#allocation9 + $0x358] sm:$0xff]
        %v1390 = vld [vmem:[#allocation9 + $0x360] sm:$0xff]
        %v1391 = vld [vmem:[#allocation9 + $0x368] sm:$0xff]
        %v1392 = vld [vmem:[#allocation9 + $0x370] sm:$0xff]
        %v1393 = vld [vmem:[#allocation9 + $0x378] sm:$0xff]
        %v1394 = vld [vmem:[#allocation9 + $0x380] sm:$0xff]
        %v1395 = vld [vmem:[#allocation9 + $0x388] sm:$0xff]
        %v1396 = vld [vmem:[#allocation9 + $0x390] sm:$0xff]
        %v1397 = vld [vmem:[#allocation9 + $0x398] sm:$0xff]
        %v1398 = vld [vmem:[#allocation9 + $0x3a0] sm:$0xff]
        %v1399 = vld [vmem:[#allocation9 + $0x3a8] sm:$0xff]
        %v1400 = vld [vmem:[#allocation9 + $0x3b0] sm:$0xff]
        %v1401 = vld [vmem:[#allocation9 + $0x3b8] sm:$0xff]
        %v1402 = vld [vmem:[#allocation9 + $0x3c0] sm:$0xff]
        %v1403 = vld [vmem:[#allocation9 + $0x3c8] sm:$0xff]
        %v1404 = vld [vmem:[#allocation9 + $0x3d0] sm:$0xff]
        %v1405 = vld [vmem:[#allocation9 + $0x3d8] sm:$0xff]
        %v1406 = vld [vmem:[#allocation9 + $0x3e0] sm:$0xff]
        %v1407 = vld [vmem:[#allocation9 + $0x3e8] sm:$0xff]
        %v1408 = vld [vmem:[#allocation9 + $0x3f0] sm:$0xff]
        %v1409 = vld [vmem:[#allocation9 + $0x3f8] sm:$0xff]
        %v1410 = vld [vmem:[%s5] sm:$0xf]
        %v1412 = vlaneseq
        %v1413 = vshrl.u32 %v1412, 7
        %v1414 = vsub.s32 0, %v1413
        %v1415 = vrot.slane %v1410, %v1414
        %v1416 = vlaneseq
        %v1417 = vshrl.u32 %v1416, 7
        %v1418 = vsub.s32 1, %v1417
        %v1419 = vrot.slane %v1410, %v1418
        %v1420 = vlaneseq
        %v1421 = vshrl.u32 %v1420, 7
        %v1422 = vsub.s32 2, %v1421
        %v1423 = vrot.slane %v1410, %v1422
        %v1424 = vlaneseq
        %v1425 = vshrl.u32 %v1424, 7
        %v1426 = vsub.s32 3, %v1425
        %v1427 = vrot.slane %v1410, %v1426
        %v1560 = vunpack.c.l.b16 %v1282
        %v1561 = vunpack.c.h.b16 %v1282
        %v1562 = vunpack.c.l.b16 %v1283
        %v1563 = vunpack.c.h.b16 %v1283
        %v1564 = vunpack.c.l.b16 %v1284
        %v1565 = vunpack.c.h.b16 %v1284
        %v1566 = vunpack.c.l.b16 %v1285
        %v1567 = vunpack.c.h.b16 %v1285
        %v1568 = vunpack.c.l.b16 %v1286
        %v1569 = vunpack.c.h.b16 %v1286
        %v1570 = vunpack.c.l.b16 %v1287
        %v1571 = vunpack.c.h.b16 %v1287
        %v1572 = vunpack.c.l.b16 %v1288
        %v1573 = vunpack.c.h.b16 %v1288
        %v1574 = vunpack.c.l.b16 %v1289
        %v1575 = vunpack.c.h.b16 %v1289
        %v1576 = vunpack.c.l.b16 %v1290
        %v1577 = vunpack.c.h.b16 %v1290
        %v1578 = vunpack.c.l.b16 %v1291
        %v1579 = vunpack.c.h.b16 %v1291
        %v1580 = vunpack.c.l.b16 %v1292
        %v1581 = vunpack.c.h.b16 %v1292
        %v1582 = vunpack.c.l.b16 %v1293
        %v1583 = vunpack.c.h.b16 %v1293
        %v1584 = vunpack.c.l.b16 %v1294
        %v1585 = vunpack.c.h.b16 %v1294
        %v1586 = vunpack.c.l.b16 %v1295
        %v1587 = vunpack.c.h.b16 %v1295
        %v1588 = vunpack.c.l.b16 %v1296
        %v1589 = vunpack.c.h.b16 %v1296
        %v1590 = vunpack.c.l.b16 %v1297
        %v1591 = vunpack.c.h.b16 %v1297
        %v1592 = vunpack.c.l.b16 %v1298
        %v1593 = vunpack.c.h.b16 %v1298
        %v1594 = vunpack.c.l.b16 %v1299
        %v1595 = vunpack.c.h.b16 %v1299
        %v1596 = vunpack.c.l.b16 %v1300
        %v1597 = vunpack.c.h.b16 %v1300
        %v1598 = vunpack.c.l.b16 %v1301
        %v1599 = vunpack.c.h.b16 %v1301
        %v1600 = vunpack.c.l.b16 %v1302
        %v1601 = vunpack.c.h.b16 %v1302
        %v1602 = vunpack.c.l.b16 %v1303
        %v1603 = vunpack.c.h.b16 %v1303
        %v1604 = vunpack.c.l.b16 %v1304
        %v1605 = vunpack.c.h.b16 %v1304
        %v1606 = vunpack.c.l.b16 %v1305
        %v1607 = vunpack.c.h.b16 %v1305
        %v1608 = vunpack.c.l.b16 %v1306
        %v1609 = vunpack.c.h.b16 %v1306
        %v1610 = vunpack.c.l.b16 %v1307
        %v1611 = vunpack.c.h.b16 %v1307
        %v1612 = vunpack.c.l.b16 %v1308
        %v1613 = vunpack.c.h.b16 %v1308
        %v1614 = vunpack.c.l.b16 %v1309
        %v1615 = vunpack.c.h.b16 %v1309
        %v1616 = vunpack.c.l.b16 %v1310
        %v1617 = vunpack.c.h.b16 %v1310
        %v1618 = vunpack.c.l.b16 %v1311
        %v1619 = vunpack.c.h.b16 %v1311
        %v1620 = vunpack.c.l.b16 %v1312
        %v1621 = vunpack.c.h.b16 %v1312
        %v1622 = vunpack.c.l.b16 %v1313
        %v1623 = vunpack.c.h.b16 %v1313
        %v1624 = vunpack.c.l.b16 %v1314
        %v1625 = vunpack.c.h.b16 %v1314
        %v1626 = vunpack.c.l.b16 %v1315
        %v1627 = vunpack.c.h.b16 %v1315
        %v1628 = vunpack.c.l.b16 %v1316
        %v1629 = vunpack.c.h.b16 %v1316
        %v1630 = vunpack.c.l.b16 %v1317
        %v1631 = vunpack.c.h.b16 %v1317
        %v1632 = vunpack.c.l.b16 %v1318
        %v1633 = vunpack.c.h.b16 %v1318
        %v1634 = vunpack.c.l.b16 %v1319
        %v1635 = vunpack.c.h.b16 %v1319
        %v1636 = vunpack.c.l.b16 %v1320
        %v1637 = vunpack.c.h.b16 %v1320
        %v1638 = vunpack.c.l.b16 %v1321
        %v1639 = vunpack.c.h.b16 %v1321
        %v1640 = vunpack.c.l.b16 %v1322
        %v1641 = vunpack.c.h.b16 %v1322
        %v1642 = vunpack.c.l.b16 %v1323
        %v1643 = vunpack.c.h.b16 %v1323
        %v1644 = vunpack.c.l.b16 %v1324
        %v1645 = vunpack.c.h.b16 %v1324
        %v1646 = vunpack.c.l.b16 %v1325
        %v1647 = vunpack.c.h.b16 %v1325
        %v1648 = vunpack.c.l.b16 %v1326
        %v1649 = vunpack.c.h.b16 %v1326
        %v1650 = vunpack.c.l.b16 %v1327
        %v1651 = vunpack.c.h.b16 %v1327
        %v1652 = vunpack.c.l.b16 %v1328
        %v1653 = vunpack.c.h.b16 %v1328
        %v1654 = vunpack.c.l.b16 %v1329
        %v1655 = vunpack.c.h.b16 %v1329
        %v1656 = vunpack.c.l.b16 %v1330
        %v1657 = vunpack.c.h.b16 %v1330
        %v1658 = vunpack.c.l.b16 %v1331
        %v1659 = vunpack.c.h.b16 %v1331
        %v1660 = vunpack.c.l.b16 %v1332
        %v1661 = vunpack.c.h.b16 %v1332
        %v1662 = vunpack.c.l.b16 %v1333
        %v1663 = vunpack.c.h.b16 %v1333
        %v1664 = vunpack.c.l.b16 %v1334
        %v1665 = vunpack.c.h.b16 %v1334
        %v1666 = vunpack.c.l.b16 %v1335
        %v1667 = vunpack.c.h.b16 %v1335
        %v1668 = vunpack.c.l.b16 %v1336
        %v1669 = vunpack.c.h.b16 %v1336
        %v1670 = vunpack.c.l.b16 %v1337
        %v1671 = vunpack.c.h.b16 %v1337
        %v1672 = vunpack.c.l.b16 %v1338
        %v1673 = vunpack.c.h.b16 %v1338
        %v1674 = vunpack.c.l.b16 %v1339
        %v1675 = vunpack.c.h.b16 %v1339
        %v1676 = vunpack.c.l.b16 %v1340
        %v1677 = vunpack.c.h.b16 %v1340
        %v1678 = vunpack.c.l.b16 %v1341
        %v1679 = vunpack.c.h.b16 %v1341
        %v1680 = vunpack.c.l.b16 %v1342
        %v1681 = vunpack.c.h.b16 %v1342
        %v1682 = vunpack.c.l.b16 %v1343
        %v1683 = vunpack.c.h.b16 %v1343
        %v1684 = vunpack.c.l.b16 %v1344
        %v1685 = vunpack.c.h.b16 %v1344
        %v1686 = vunpack.c.l.b16 %v1345
        %v1687 = vunpack.c.h.b16 %v1345
        %v1688 = vunpack.c.l.b16 %v1346
        %v1689 = vunpack.c.h.b16 %v1346
        %v1690 = vunpack.c.l.b16 %v1347
        %v1691 = vunpack.c.h.b16 %v1347
        %v1692 = vunpack.c.l.b16 %v1348
        %v1693 = vunpack.c.h.b16 %v1348
        %v1694 = vunpack.c.l.b16 %v1349
        %v1695 = vunpack.c.h.b16 %v1349
        %v1696 = vunpack.c.l.b16 %v1350
        %v1697 = vunpack.c.h.b16 %v1350
        %v1698 = vunpack.c.l.b16 %v1351
        %v1699 = vunpack.c.h.b16 %v1351
        %v1700 = vunpack.c.l.b16 %v1352
        %v1701 = vunpack.c.h.b16 %v1352
        %v1702 = vunpack.c.l.b16 %v1353
        %v1703 = vunpack.c.h.b16 %v1353
        %v1704 = vunpack.c.l.b16 %v1354
        %v1705 = vunpack.c.h.b16 %v1354
        %v1706 = vunpack.c.l.b16 %v1355
        %v1707 = vunpack.c.h.b16 %v1355
        %v1708 = vunpack.c.l.b16 %v1356
        %v1709 = vunpack.c.h.b16 %v1356
        %v1710 = vunpack.c.l.b16 %v1357
        %v1711 = vunpack.c.h.b16 %v1357
        %v1712 = vunpack.c.l.b16 %v1358
        %v1713 = vunpack.c.h.b16 %v1358
        %v1714 = vunpack.c.l.b16 %v1359
        %v1715 = vunpack.c.h.b16 %v1359
        %v1716 = vunpack.c.l.b16 %v1360
        %v1717 = vunpack.c.h.b16 %v1360
        %v1718 = vunpack.c.l.b16 %v1361
        %v1719 = vunpack.c.h.b16 %v1361
        %v1720 = vunpack.c.l.b16 %v1362
        %v1721 = vunpack.c.h.b16 %v1362
        %v1722 = vunpack.c.l.b16 %v1363
        %v1723 = vunpack.c.h.b16 %v1363
        %v1724 = vunpack.c.l.b16 %v1364
        %v1725 = vunpack.c.h.b16 %v1364
        %v1726 = vunpack.c.l.b16 %v1365
        %v1727 = vunpack.c.h.b16 %v1365
        %v1728 = vunpack.c.l.b16 %v1366
        %v1729 = vunpack.c.h.b16 %v1366
        %v1730 = vunpack.c.l.b16 %v1367
        %v1731 = vunpack.c.h.b16 %v1367
        %v1732 = vunpack.c.l.b16 %v1368
        %v1733 = vunpack.c.h.b16 %v1368
        %v1734 = vunpack.c.l.b16 %v1369
        %v1735 = vunpack.c.h.b16 %v1369
        %v1736 = vunpack.c.l.b16 %v1370
        %v1737 = vunpack.c.h.b16 %v1370
        %v1738 = vunpack.c.l.b16 %v1371
        %v1739 = vunpack.c.h.b16 %v1371
        %v1740 = vunpack.c.l.b16 %v1372
        %v1741 = vunpack.c.h.b16 %v1372
        %v1742 = vunpack.c.l.b16 %v1373
        %v1743 = vunpack.c.h.b16 %v1373
        %v1744 = vunpack.c.l.b16 %v1374
        %v1745 = vunpack.c.h.b16 %v1374
        %v1746 = vunpack.c.l.b16 %v1375
        %v1747 = vunpack.c.h.b16 %v1375
        %v1748 = vunpack.c.l.b16 %v1376
        %v1749 = vunpack.c.h.b16 %v1376
        %v1750 = vunpack.c.l.b16 %v1377
        %v1751 = vunpack.c.h.b16 %v1377
        %v1752 = vunpack.c.l.b16 %v1378
        %v1753 = vunpack.c.h.b16 %v1378
        %v1754 = vunpack.c.l.b16 %v1379
        %v1755 = vunpack.c.h.b16 %v1379
        %v1756 = vunpack.c.l.b16 %v1380
        %v1757 = vunpack.c.h.b16 %v1380
        %v1758 = vunpack.c.l.b16 %v1381
        %v1759 = vunpack.c.h.b16 %v1381
        %v1760 = vunpack.c.l.b16 %v1382
        %v1761 = vunpack.c.h.b16 %v1382
        %v1762 = vunpack.c.l.b16 %v1383
        %v1763 = vunpack.c.h.b16 %v1383
        %v1764 = vunpack.c.l.b16 %v1384
        %v1765 = vunpack.c.h.b16 %v1384
        %v1766 = vunpack.c.l.b16 %v1385
        %v1767 = vunpack.c.h.b16 %v1385
        %v1768 = vunpack.c.l.b16 %v1386
        %v1769 = vunpack.c.h.b16 %v1386
        %v1770 = vunpack.c.l.b16 %v1387
        %v1771 = vunpack.c.h.b16 %v1387
        %v1772 = vunpack.c.l.b16 %v1388
        %v1773 = vunpack.c.h.b16 %v1388
        %v1774 = vunpack.c.l.b16 %v1389
        %v1775 = vunpack.c.h.b16 %v1389
        %v1776 = vunpack.c.l.b16 %v1390
        %v1777 = vunpack.c.h.b16 %v1390
        %v1778 = vunpack.c.l.b16 %v1391
        %v1779 = vunpack.c.h.b16 %v1391
        %v1780 = vunpack.c.l.b16 %v1392
        %v1781 = vunpack.c.h.b16 %v1392
        %v1782 = vunpack.c.l.b16 %v1393
        %v1783 = vunpack.c.h.b16 %v1393
        %v1784 = vunpack.c.l.b16 %v1394
        %v1785 = vunpack.c.h.b16 %v1394
        %v1786 = vunpack.c.l.b16 %v1395
        %v1787 = vunpack.c.h.b16 %v1395
        %v1788 = vunpack.c.l.b16 %v1396
        %v1789 = vunpack.c.h.b16 %v1396
        %v1790 = vunpack.c.l.b16 %v1397
        %v1791 = vunpack.c.h.b16 %v1397
        %v1792 = vunpack.c.l.b16 %v1398
        %v1793 = vunpack.c.h.b16 %v1398
        %v1794 = vunpack.c.l.b16 %v1399
        %v1795 = vunpack.c.h.b16 %v1399
        %v1796 = vunpack.c.l.b16 %v1400
        %v1797 = vunpack.c.h.b16 %v1400
        %v1798 = vunpack.c.l.b16 %v1401
        %v1799 = vunpack.c.h.b16 %v1401
        %v1800 = vunpack.c.l.b16 %v1402
        %v1801 = vunpack.c.h.b16 %v1402
        %v1802 = vunpack.c.l.b16 %v1403
        %v1803 = vunpack.c.h.b16 %v1403
        %v1804 = vunpack.c.l.b16 %v1404
        %v1805 = vunpack.c.h.b16 %v1404
        %v1806 = vunpack.c.l.b16 %v1405
        %v1807 = vunpack.c.h.b16 %v1405
        %v1808 = vunpack.c.l.b16 %v1406
        %v1809 = vunpack.c.h.b16 %v1406
        %v1810 = vunpack.c.l.b16 %v1407
        %v1811 = vunpack.c.h.b16 %v1407
        %v1812 = vunpack.c.l.b16 %v1408
        %v1813 = vunpack.c.h.b16 %v1408
        %v1814 = vunpack.c.l.b16 %v1409
        %v1815 = vunpack.c.h.b16 %v1409
        %v1816 = vpack.c.b16 %v1564, %v1560
        %v1817 = vpack.c.b16 %v1565, %v1561
        %v1818 = vpack.c.b16 %v1566, %v1562
        %v1819 = vpack.c.b16 %v1567, %v1563
        %v1820 = vpack.c.b16 %v1572, %v1568
        %v1821 = vpack.c.b16 %v1573, %v1569
        %v1822 = vpack.c.b16 %v1574, %v1570
        %v1823 = vpack.c.b16 %v1575, %v1571
        %v1824 = vpack.c.b16 %v1580, %v1576
        %v1825 = vpack.c.b16 %v1581, %v1577
        %v1826 = vpack.c.b16 %v1582, %v1578
        %v1827 = vpack.c.b16 %v1583, %v1579
        %v1828 = vpack.c.b16 %v1588, %v1584
        %v1829 = vpack.c.b16 %v1589, %v1585
        %v1830 = vpack.c.b16 %v1590, %v1586
        %v1831 = vpack.c.b16 %v1591, %v1587
        %v1832 = vpack.c.b16 %v1596, %v1592
        %v1833 = vpack.c.b16 %v1597, %v1593
        %v1834 = vpack.c.b16 %v1598, %v1594
        %v1835 = vpack.c.b16 %v1599, %v1595
        %v1836 = vpack.c.b16 %v1604, %v1600
        %v1837 = vpack.c.b16 %v1605, %v1601
        %v1838 = vpack.c.b16 %v1606, %v1602
        %v1839 = vpack.c.b16 %v1607, %v1603
        %v1840 = vpack.c.b16 %v1612, %v1608
        %v1841 = vpack.c.b16 %v1613, %v1609
        %v1842 = vpack.c.b16 %v1614, %v1610
        %v1843 = vpack.c.b16 %v1615, %v1611
        %v1844 = vpack.c.b16 %v1620, %v1616
        %v1845 = vpack.c.b16 %v1621, %v1617
        %v1846 = vpack.c.b16 %v1622, %v1618
        %v1847 = vpack.c.b16 %v1623, %v1619
        %v1848 = vpack.c.b16 %v1628, %v1624
        %v1849 = vpack.c.b16 %v1629, %v1625
        %v1850 = vpack.c.b16 %v1630, %v1626
        %v1851 = vpack.c.b16 %v1631, %v1627
        %v1852 = vpack.c.b16 %v1636, %v1632
        %v1853 = vpack.c.b16 %v1637, %v1633
        %v1854 = vpack.c.b16 %v1638, %v1634
        %v1855 = vpack.c.b16 %v1639, %v1635
        %v1856 = vpack.c.b16 %v1644, %v1640
        %v1857 = vpack.c.b16 %v1645, %v1641
        %v1858 = vpack.c.b16 %v1646, %v1642
        %v1859 = vpack.c.b16 %v1647, %v1643
        %v1860 = vpack.c.b16 %v1652, %v1648
        %v1861 = vpack.c.b16 %v1653, %v1649
        %v1862 = vpack.c.b16 %v1654, %v1650
        %v1863 = vpack.c.b16 %v1655, %v1651
        %v1864 = vpack.c.b16 %v1660, %v1656
        %v1865 = vpack.c.b16 %v1661, %v1657
        %v1866 = vpack.c.b16 %v1662, %v1658
        %v1867 = vpack.c.b16 %v1663, %v1659
        %v1868 = vpack.c.b16 %v1668, %v1664
        %v1869 = vpack.c.b16 %v1669, %v1665
        %v1870 = vpack.c.b16 %v1670, %v1666
        %v1871 = vpack.c.b16 %v1671, %v1667
        %v1872 = vpack.c.b16 %v1676, %v1672
        %v1873 = vpack.c.b16 %v1677, %v1673
        %v1874 = vpack.c.b16 %v1678, %v1674
        %v1875 = vpack.c.b16 %v1679, %v1675
        %v1876 = vpack.c.b16 %v1684, %v1680
        %v1877 = vpack.c.b16 %v1685, %v1681
        %v1878 = vpack.c.b16 %v1686, %v1682
        %v1879 = vpack.c.b16 %v1687, %v1683
        %v1880 = vpack.c.b16 %v1692, %v1688
        %v1881 = vpack.c.b16 %v1693, %v1689
        %v1882 = vpack.c.b16 %v1694, %v1690
        %v1883 = vpack.c.b16 %v1695, %v1691
        %v1884 = vpack.c.b16 %v1700, %v1696
        %v1885 = vpack.c.b16 %v1701, %v1697
        %v1886 = vpack.c.b16 %v1702, %v1698
        %v1887 = vpack.c.b16 %v1703, %v1699
        %v1888 = vpack.c.b16 %v1708, %v1704
        %v1889 = vpack.c.b16 %v1709, %v1705
        %v1890 = vpack.c.b16 %v1710, %v1706
        %v1891 = vpack.c.b16 %v1711, %v1707
        %v1892 = vpack.c.b16 %v1716, %v1712
        %v1893 = vpack.c.b16 %v1717, %v1713
        %v1894 = vpack.c.b16 %v1718, %v1714
        %v1895 = vpack.c.b16 %v1719, %v1715
        %v1896 = vpack.c.b16 %v1724, %v1720
        %v1897 = vpack.c.b16 %v1725, %v1721
        %v1898 = vpack.c.b16 %v1726, %v1722
        %v1899 = vpack.c.b16 %v1727, %v1723
        %v1900 = vpack.c.b16 %v1732, %v1728
        %v1901 = vpack.c.b16 %v1733, %v1729
        %v1902 = vpack.c.b16 %v1734, %v1730
        %v1903 = vpack.c.b16 %v1735, %v1731
        %v1904 = vpack.c.b16 %v1740, %v1736
        %v1905 = vpack.c.b16 %v1741, %v1737
        %v1906 = vpack.c.b16 %v1742, %v1738
        %v1907 = vpack.c.b16 %v1743, %v1739
        %v1908 = vpack.c.b16 %v1748, %v1744
        %v1909 = vpack.c.b16 %v1749, %v1745
        %v1910 = vpack.c.b16 %v1750, %v1746
        %v1911 = vpack.c.b16 %v1751, %v1747
        %v1912 = vpack.c.b16 %v1756, %v1752
        %v1913 = vpack.c.b16 %v1757, %v1753
        %v1914 = vpack.c.b16 %v1758, %v1754
        %v1915 = vpack.c.b16 %v1759, %v1755
        %v1916 = vpack.c.b16 %v1764, %v1760
        %v1917 = vpack.c.b16 %v1765, %v1761
        %v1918 = vpack.c.b16 %v1766, %v1762
        %v1919 = vpack.c.b16 %v1767, %v1763
        %v1920 = vpack.c.b16 %v1772, %v1768
        %v1921 = vpack.c.b16 %v1773, %v1769
        %v1922 = vpack.c.b16 %v1774, %v1770
        %v1923 = vpack.c.b16 %v1775, %v1771
        %v1924 = vpack.c.b16 %v1780, %v1776
        %v1925 = vpack.c.b16 %v1781, %v1777
        %v1926 = vpack.c.b16 %v1782, %v1778
        %v1927 = vpack.c.b16 %v1783, %v1779
        %v1928 = vpack.c.b16 %v1788, %v1784
        %v1929 = vpack.c.b16 %v1789, %v1785
        %v1930 = vpack.c.b16 %v1790, %v1786
        %v1931 = vpack.c.b16 %v1791, %v1787
        %v1932 = vpack.c.b16 %v1796, %v1792
        %v1933 = vpack.c.b16 %v1797, %v1793
        %v1934 = vpack.c.b16 %v1798, %v1794
        %v1935 = vpack.c.b16 %v1799, %v1795
        %v1936 = vpack.c.b16 %v1804, %v1800
        %v1937 = vpack.c.b16 %v1805, %v1801
        %v1938 = vpack.c.b16 %v1806, %v1802
        %v1939 = vpack.c.b16 %v1807, %v1803
        %v1940 = vpack.c.b16 %v1812, %v1808
        %v1941 = vpack.c.b16 %v1813, %v1809
        %v1942 = vpack.c.b16 %v1814, %v1810
        %v1943 = vpack.c.b16 %v1815, %v1811
        %2072 = vmatprep.subr.bf16.mxu0 %v1817
        %2073 = vmatpush1.bf16.msra.mxu0 %v1816
        %2074 = vmatprep.subr.bf16.mxu0 %v1821
        %2075 = vmatpush1.bf16.msra.mxu0 %v1820
        %2076 = vmatprep.subr.bf16.mxu0 %v1825
        %2077 = vmatpush1.bf16.msra.mxu0 %v1824
        %2078 = vmatprep.subr.bf16.mxu0 %v1829
        %2079 = vmatpush1.bf16.msra.mxu0 %v1828
        %2080 = vmatprep.subr.bf16.mxu0 %v1833
        %2081 = vmatpush1.bf16.msra.mxu0 %v1832
        %2082 = vmatprep.subr.bf16.mxu0 %v1837
        %2083 = vmatpush1.bf16.msra.mxu0 %v1836
        %2084 = vmatprep.subr.bf16.mxu0 %v1841
        %2085 = vmatpush1.bf16.msra.mxu0 %v1840
        %2086 = vmatprep.subr.bf16.mxu0 %v1845
        %2087 = vmatpush1.bf16.msra.mxu0 %v1844
        %2088 = vmatprep.subr.bf16.mxu0 %v1849
        %2089 = vmatpush1.bf16.msra.mxu0 %v1848
        %2090 = vmatprep.subr.bf16.mxu0 %v1853
        %2091 = vmatpush1.bf16.msra.mxu0 %v1852
        %2092 = vmatprep.subr.bf16.mxu0 %v1857
        %2093 = vmatpush1.bf16.msra.mxu0 %v1856
        %2094 = vmatprep.subr.bf16.mxu0 %v1861
        %2095 = vmatpush1.bf16.msra.mxu0 %v1860
        %2096 = vmatprep.subr.bf16.mxu0 %v1865
        %2097 = vmatpush1.bf16.msra.mxu0 %v1864
        %2098 = vmatprep.subr.bf16.mxu0 %v1869
        %2099 = vmatpush1.bf16.msra.mxu0 %v1868
        %2100 = vmatprep.subr.bf16.mxu0 %v1873
        %2101 = vmatpush1.bf16.msra.mxu0 %v1872
        %2102 = vmatprep.subr.bf16.mxu0 %v1877
        %2103 = vmatpush1.bf16.msra.mxu0 %v1876
        %2104 = vmatprep.mubr.bf16.mxu0 %v1279
        %2105 = vmatmul.mubr.bf16.gmra.mrb[0].mxu0 %v1278
        %v2106 = vpop.f32.mrb[0].mxu0
        %v2107 = vadd.f32 %v1415, %v2106
        %v2108 = vpop.f32.mrb[0].mxu0
        %v2109 = vadd.f32 %v1419, %v2108
        %v2110 = vpop.f32.mrb[0].mxu0
        %v2111 = vadd.f32 %v1415, %v2110
        %v2112 = vpop.f32.mrb[0].mxu0
        %v2113 = vadd.f32 %v1419, %v2112
        %2114 = vdwg.mxu0
        %2115 = vmatprep.subr.bf16.mxu0 %v1881
        %2116 = vmatpush1.bf16.msra.mxu0 %v1880
        %2117 = vmatprep.subr.bf16.mxu0 %v1885
        %2118 = vmatpush1.bf16.msra.mxu0 %v1884
        %2119 = vmatprep.subr.bf16.mxu0 %v1889
        %2120 = vmatpush1.bf16.msra.mxu0 %v1888
        %2121 = vmatprep.subr.bf16.mxu0 %v1893
        %2122 = vmatpush1.bf16.msra.mxu0 %v1892
        %2123 = vmatprep.subr.bf16.mxu0 %v1897
        %2124 = vmatpush1.bf16.msra.mxu0 %v1896
        %2125 = vmatprep.subr.bf16.mxu0 %v1901
        %2126 = vmatpush1.bf16.msra.mxu0 %v1900
        %2127 = vmatprep.subr.bf16.mxu0 %v1905
        %2128 = vmatpush1.bf16.msra.mxu0 %v1904
        %2129 = vmatprep.subr.bf16.mxu0 %v1909
        %2130 = vmatpush1.bf16.msra.mxu0 %v1908
        %2131 = vmatprep.subr.bf16.mxu0 %v1913
        %2132 = vmatpush1.bf16.msra.mxu0 %v1912
        %2133 = vmatprep.subr.bf16.mxu0 %v1917
        %2134 = vmatpush1.bf16.msra.mxu0 %v1916
        %2135 = vmatprep.subr.bf16.mxu0 %v1921
        %2136 = vmatpush1.bf16.msra.mxu0 %v1920
        %2137 = vmatprep.subr.bf16.mxu0 %v1925
        %2138 = vmatpush1.bf16.msra.mxu0 %v1924
        %2139 = vmatprep.subr.bf16.mxu0 %v1929
        %2140 = vmatpush1.bf16.msra.mxu0 %v1928
        %2141 = vmatprep.subr.bf16.mxu0 %v1933
        %2142 = vmatpush1.bf16.msra.mxu0 %v1932
        %2143 = vmatprep.subr.bf16.mxu0 %v1937
        %2144 = vmatpush1.bf16.msra.mxu0 %v1936
        %2145 = vmatprep.subr.bf16.mxu0 %v1941
        %2146 = vmatpush1.bf16.msra.mxu0 %v1940
        %2147 = vmatprep.mubr.bf16.mxu0 %v1281
        %2148 = vmatmul.mubr.bf16.gmra.mrb[0].mxu0 %v1280
        %v2149 = vpop.f32.mrb[0].mxu0
        %v2150 = vadd.f32 %v2107, %v2149
        %v2151 = vpop.f32.mrb[0].mxu0
        %v2152 = vadd.f32 %v2109, %v2151
        %v2153 = vpop.f32.mrb[0].mxu0
        %v2154 = vadd.f32 %v2111, %v2153
        %v2155 = vpop.f32.mrb[0].mxu0
        %v2156 = vadd.f32 %v2113, %v2155
        %2157 = vdwg.mxu0
        %2158 = vmatprep.subr.bf16.mxu0 %v1819
        %2159 = vmatpush1.bf16.msra.mxu0 %v1818
        %2160 = vmatprep.subr.bf16.mxu0 %v1823
        %2161 = vmatpush1.bf16.msra.mxu0 %v1822
        %2162 = vmatprep.subr.bf16.mxu0 %v1827
        %2163 = vmatpush1.bf16.msra.mxu0 %v1826
        %2164 = vmatprep.subr.bf16.mxu0 %v1831
        %2165 = vmatpush1.bf16.msra.mxu0 %v1830
        %2166 = vmatprep.subr.bf16.mxu0 %v1835
        %2167 = vmatpush1.bf16.msra.mxu0 %v1834
        %2168 = vmatprep.subr.bf16.mxu0 %v1839
        %2169 = vmatpush1.bf16.msra.mxu0 %v1838
        %2170 = vmatprep.subr.bf16.mxu0 %v1843
        %2171 = vmatpush1.bf16.msra.mxu0 %v1842
        %2172 = vmatprep.subr.bf16.mxu0 %v1847
        %2173 = vmatpush1.bf16.msra.mxu0 %v1846
        %2174 = vmatprep.subr.bf16.mxu0 %v1851
        %2175 = vmatpush1.bf16.msra.mxu0 %v1850
        %2176 = vmatprep.subr.bf16.mxu0 %v1855
        %2177 = vmatpush1.bf16.msra.mxu0 %v1854
        %2178 = vmatprep.subr.bf16.mxu0 %v1859
        %2179 = vmatpush1.bf16.msra.mxu0 %v1858
        %2180 = vmatprep.subr.bf16.mxu0 %v1863
        %2181 = vmatpush1.bf16.msra.mxu0 %v1862
        %2182 = vmatprep.subr.bf16.mxu0 %v1867
        %2183 = vmatpush1.bf16.msra.mxu0 %v1866
        %2184 = vmatprep.subr.bf16.mxu0 %v1871
        %2185 = vmatpush1.bf16.msra.mxu0 %v1870
        %2186 = vmatprep.subr.bf16.mxu0 %v1875
        %2187 = vmatpush1.bf16.msra.mxu0 %v1874
        %2188 = vmatprep.subr.bf16.mxu0 %v1879
        %2189 = vmatpush1.bf16.msra.mxu0 %v1878
        %2190 = vmatprep.mubr.bf16.mxu0 %v1279
        %2191 = vmatmul.mubr.bf16.gmra.mrb[0].mxu0 %v1278
        %v2192 = vpop.f32.mrb[0].mxu0
        %v2193 = vadd.f32 %v1423, %v2192
        %v2194 = vpop.f32.mrb[0].mxu0
        %v2195 = vadd.f32 %v1427, %v2194
        %v2196 = vpop.f32.mrb[0].mxu0
        %v2197 = vadd.f32 %v1423, %v2196
        %v2198 = vpop.f32.mrb[0].mxu0
        %v2199 = vadd.f32 %v1427, %v2198
        %2200 = vdwg.mxu0
        %2201 = vmatprep.subr.bf16.mxu0 %v1883
        %2202 = vmatpush1.bf16.msra.mxu0 %v1882
        %2203 = vmatprep.subr.bf16.mxu0 %v1887
        %2204 = vmatpush1.bf16.msra.mxu0 %v1886
        %2205 = vmatprep.subr.bf16.mxu0 %v1891
        %2206 = vmatpush1.bf16.msra.mxu0 %v1890
        %2207 = vmatprep.subr.bf16.mxu0 %v1895
        %2208 = vmatpush1.bf16.msra.mxu0 %v1894
        %2209 = vmatprep.subr.bf16.mxu0 %v1899
        %2210 = vmatpush1.bf16.msra.mxu0 %v1898
        %2211 = vmatprep.subr.bf16.mxu0 %v1903
        %2212 = vmatpush1.bf16.msra.mxu0 %v1902
        %2213 = vmatprep.subr.bf16.mxu0 %v1907
        %2214 = vmatpush1.bf16.msra.mxu0 %v1906
        %2215 = vmatprep.subr.bf16.mxu0 %v1911
        %2216 = vmatpush1.bf16.msra.mxu0 %v1910
        %2217 = vmatprep.subr.bf16.mxu0 %v1915
        %2218 = vmatpush1.bf16.msra.mxu0 %v1914
        %2219 = vmatprep.subr.bf16.mxu0 %v1919
        %2220 = vmatpush1.bf16.msra.mxu0 %v1918
        %2221 = vmatprep.subr.bf16.mxu0 %v1923
        %2222 = vmatpush1.bf16.msra.mxu0 %v1922
        %2223 = vmatprep.subr.bf16.mxu0 %v1927
        %2224 = vmatpush1.bf16.msra.mxu0 %v1926
        %2225 = vmatprep.subr.bf16.mxu0 %v1931
        %2226 = vmatpush1.bf16.msra.mxu0 %v1930
        %2227 = vmatprep.subr.bf16.mxu0 %v1935
        %2228 = vmatpush1.bf16.msra.mxu0 %v1934
        %2229 = vmatprep.subr.bf16.mxu0 %v1939
        %2230 = vmatpush1.bf16.msra.mxu0 %v1938
        %2231 = vmatprep.subr.bf16.mxu0 %v1943
        %2232 = vmatpush1.bf16.msra.mxu0 %v1942
        %2233 = vmatprep.mubr.bf16.mxu0 %v1281
        %2234 = vmatmul.mubr.bf16.gmra.mrb[0].mxu0 %v1280
        %v2235 = vpop.f32.mrb[0].mxu0
        %v2236 = vadd.f32 %v2193, %v2235
        %v2237 = vpop.f32.mrb[0].mxu0
        %v2238 = vadd.f32 %v2195, %v2237
        %v2239 = vpop.f32.mrb[0].mxu0
        %v2240 = vadd.f32 %v2197, %v2239
        %v2241 = vpop.f32.mrb[0].mxu0
        %v2242 = vadd.f32 %v2199, %v2241
        %2243 = vdwg.mxu0
        %2244 = vst [vmem:[%s273] sm:$0xff] %v2150
        %2245 = vst [vmem:[%s273 + $0x8] sm:$0xff] %v2152
        %2246 = vst [vmem:[%s273 + $0x10] sm:$0xff] %v2236
        %2247 = vst [vmem:[%s273 + $0x18] sm:$0xff] %v2238
        %2248 = vst [vmem:[%s273 + $0x20] sm:$0xff] %v2154
        %2249 = vst [vmem:[%s273 + $0x28] sm:$0xff] %v2156
        %2250 = vst [vmem:[%s273 + $0x30] sm:$0xff] %v2240
        %2251 = vst [vmem:[%s273 + $0x38] sm:$0xff] %v2242
        %s2252 = sand.u32 %s143, 1
        %s2253 = scalar_lea.sflag [#allocation6], %s2252
        %s2254 = sand.u32 %s143, 1
        %s2255 = smul.addr %s2254, 64
        %s2256 = scalar_lea.vmem [#allocation10], %s2255
        // Predicated region
        $region53: #{tpu_custom_call.1} parent=39 // pred_check
          %p2257 = pneg %p153
        $region54: #{tpu_custom_call.1} parent=39 // pred_check_branch
          %2259 = sbr.rel (%p2257) target = $region56
        $region55: #{tpu_custom_call.1} parent=39 // pred_region
          %s2260 = smul.u32 2, %s25
          %s2262 = ssub.s32 1024, 1024
          %2263 = vsyncadd %s2253, %s2262
          %s2264 = smul.addr %s2260, 4
          %s2265 = smul.addr %s2264, 128
          %s2266 = scalar_lea.hbm %s6, %s2265
          %s2267 = sshll.u32 %s2256, 4
          %s2268 = int_to_ptr.vmem [resolvable:$true] %s2267
          %2273 = dma.vmem_to_hbm [thread:$0]  %s2268, 1024, %s2266, %s2253, 512, 512, 32
        $region56: #{tpu_custom_call.1} parent=39 // pred_fallthru
          _
      $region40: #{tpu_custom_call.1} parent=5 // pred_fallthru
        _
      %p2274 = scmp.le.s32.totalorder 2, %s20
      // Predicated region
      $region57: #{tpu_custom_call.1} parent=5 // pred_check
        %p2275 = pneg %p2274
      $region58: #{tpu_custom_call.1} parent=5 // pred_check_branch
        %2277 = sbr.rel (%p2275) target = $region60
      $region59: #{tpu_custom_call.1} parent=5 // pred_region
        %s2278 = ssub.s32 %s20, 2
        // Predicated region
        $region61: #{tpu_custom_call.1} parent=59 // pred_check
          %p2279 = pneg %p159
        $region62: #{tpu_custom_call.1} parent=59 // pred_check_branch
          %2281 = sbr.rel (%p2279) target = $region64
        $region63: #{tpu_custom_call.1} parent=59 // pred_region
          %s2282 = sand.u32 %s144, 1
          %s2283 = scalar_lea.sflag [#allocation6], %s2282
          %s2284 = sand.u32 %s144, 1
          %s2285 = smul.addr %s2284, 64
          %s2286 = scalar_lea.vmem [#allocation10], %s2285
          %2287 = dma.done %s2283, 1024
        $region64: #{tpu_custom_call.1} parent=59 // pred_fallthru
          _
      $region60: #{tpu_custom_call.1} parent=5 // pred_fallthru
        _
    $region6: #{tpu_custom_call.1} parent=1 // loop_footer
      %s24 = sadd.s32 1, %s20
    $region7: #{tpu_custom_call.1} parent=1 // loop_footer_branch
      %19 = sbr.rel target = $region3
    $region8: #{tpu_custom_call.1} parent=1 // loop_exit
      _
    %2288 = vsyncpa [#allocation5], 1
    %s2289 = scalar_lea.sflag [#allocation5], 1
    %2290 = vsyncpa %s2289, 1
    %2291 = vsyncpa [#allocation8], 1
    %2292 = vsyncpa [#allocation6], 1
    %s2293 = scalar_lea.sflag [#allocation6], 1
    %2294 = vsyncpa %s2293, 1

</llo_original>
